<compile_context>
chip_gen: v7x
topology: tpu7x:2x2x1
jax: 0.10.0
libtpu: 0.0.40
codegen_flags: <defaults>
</compile_context>

<pallas_src>
import functools

import jax
import jax.numpy as jnp
import numpy as np
from jax.experimental import pallas as pl
from jax.experimental.pallas import tpu as pltpu


# ------------------------ packed parameter layout ---------------------------

ATTN_W_NAMES = ("w_in_x", "w_in_y", "w_m1", "w_m2",
                "sa_wq", "sa_wk", "sa_wv", "sa_wo", "w_po",
                "wt1", "wt2", "wc1", "wc2",
                "ca_wq", "ca_wk", "ca_wv", "ca_wo")
ATTN_B_NAMES = ("b_in", "b_m1", "b_m2",
                "sa_bq", "sa_bk", "sa_bv", "sa_bo", "b_po",
                "bt1", "bt2", "bc1", "bc2",
                "ca_bq", "ca_bk", "ca_bv", "ca_bo")
MEAN_W_NAMES = ("w_in_x", "w_in_y", "w_m1", "w_m2", "w_po")
MEAN_B_NAMES = ("b_in", "b_m1", "b_m2", "b_po")

ATTN_W_IDX = {n: i for i, n in enumerate(ATTN_W_NAMES)}
ATTN_B_IDX = {n: i for i, n in enumerate(ATTN_B_NAMES)}
MEAN_W_IDX = {n: i for i, n in enumerate(MEAN_W_NAMES)}
MEAN_B_IDX = {n: i for i, n in enumerate(MEAN_B_NAMES)}


def pack_params(params, x_dim, *, is_attentive, compute_dtype=jnp.bfloat16):
    """Pack per-matrix params into one weight stack + one bias stack.

    w_in (x_dim+y_dim, H) is split into its x / y halves so the kernel never
    needs a concatenated [x|y] input.  Weights are zero-padded to a common
    in-dim and stacked (NW, max_in, H) in `compute_dtype`; biases are stacked
    (NB, 1, H) in f32 (bias add / element-wise math stays f32).
    """
    p = dict(params)
    p["w_in_x"] = params["w_in"][:x_dim]
    p["w_in_y"] = params["w_in"][x_dim:]
    w_names = ATTN_W_NAMES if is_attentive else MEAN_W_NAMES
    b_names = ATTN_B_NAMES if is_attentive else MEAN_B_NAMES

    out_dim = p[w_names[0]].shape[1]
    max_in = max(p[n].shape[0] for n in w_names)
    ws = []
    for n in w_names:
        w = p[n]
        assert w.shape[1] == out_dim, n
        ws.append(jnp.pad(w, ((0, max_in - w.shape[0]), (0, 0))))
    w_stack = jnp.stack(ws).astype(compute_dtype)                    # (NW, max_in, H)
    b_stack = jnp.stack([p[n] for n in b_names]).astype(jnp.float32)  # (NB, 1, H)
    return w_stack, b_stack


# ----------------------------- kernel helpers -------------------------------

def _make_linear(w_ref, b_ref, w_idx, b_idx):
    """y = x @ W + b with W read from the packed stack (bf16 or f32 dot inputs,
    f32 accumulation, f32 bias add)."""
    cdt = w_ref.dtype
    max_in = w_ref.shape[1]

    def lin(x, w_name, b_name, din=None):
        if din is None or din == max_in:
            w = w_ref[w_idx[w_name]]                   # (max_in, H)
        else:
            w = w_ref[w_idx[w_name], 0:din, :]         # (din, H), static slice
        out = jnp.dot(x.astype(cdt), w, preferred_element_type=jnp.float32)
        return out + b_ref[b_idx[b_name]]              # (1, H) f32 bias

    return lin


def _softmax_attention(q, k, v, bt, nq, nk, compute_dtype):
    """Single-head scaled-dot-product attention, batched over bt (no mixing
    between batch elements).  q/k/v come in flattened (bt*n, d); returns
    flattened (bt*nq, d).  Softmax in f32; matmul inputs in compute_dtype."""
    d = q.shape[-1]
    qb = q.reshape(bt, nq, d)
    kb = k.reshape(bt, nk, d)
    vb = v.reshape(bt, nk, d)
    scale = float(d) ** -0.5
    s = jnp.einsum("bqd,bkd->bqk",
                   (qb * scale).astype(compute_dtype), kb.astype(compute_dtype),
                   preferred_element_type=jnp.float32)            # (bt, nq, nk)
    s = s - jnp.max(s, axis=-1, keepdims=True)
    p = jnp.exp(s)
    # approx reciprocal runs on the EUP slot (otherwise idle here).
    p = p * pl.reciprocal(jnp.sum(p, axis=-1, keepdims=True), approx=True)
    o = jnp.einsum("bqk,bkd->bqd", p.astype(compute_dtype), vb.astype(compute_dtype),
                   preferred_element_type=jnp.float32)            # (bt, nq, d)
    return o.reshape(bt * nq, d)


def _encode_context(xc, yc, lin, w_ref, w_idx, y_dim, bt, nc, *, with_self_attn):
    """proj_in -> MLP -> (optional self-attn) -> proj_out on flattened rows."""
    cdt = w_ref.dtype
    x_dim = xc.shape[1]

    # proj_in(cat(x, y)) == x @ Wx + y @ Wy + b  (no concatenated input needed)
    h = lin(xc, "w_in_x", "b_in", din=x_dim)
    if y_dim == 1:
        # (M,1) * (1,H) broadcast on the VPU instead of a K=1 MXU push.
        h = h + yc * w_ref[w_idx["w_in_y"], 0:1, :].astype(jnp.float32)
    else:
        h = h + jnp.dot(yc.astype(cdt), w_ref[w_idx["w_in_y"], 0:y_dim, :],
                        preferred_element_type=jnp.float32)

    # mlp: Linear -> ReLU -> Linear  (num_layers == 2)
    h = lin(h, "w_m1", "b_m1")
    h = jnp.maximum(h, 0.0)
    h = lin(h, "w_m2", "b_m2")

    if with_self_attn:
        # NOTE(perf): q/k/v kept as three (M,32)x(32,32) dots instead of one
        # fused (M,96) dot: splitting the fused result needs an unaligned
        # 32-lane slice which Mosaic may not lower at h_dim=32 (<128 lanes).
        q = lin(h, "sa_wq", "sa_bq")
        k = lin(h, "sa_wk", "sa_bk")
        v = lin(h, "sa_wv", "sa_bv")
        h = lin(_softmax_attention(q, k, v, bt, nc, nc, cdt), "sa_wo", "sa_bo")

    return lin(h, "w_po", "b_po")                                  # (bt*nc, R)


# --------------------------------- kernels ----------------------------------

def _attentive_kernel(xc_ref, yc_ref, xt_ref, w_ref, b_ref, out_ref, *,
                      w_idx, b_idx):
    bt, nc, x_dim = xc_ref.shape
    _, _, y_dim = yc_ref.shape
    _, nt, _ = xt_ref.shape
    h_dim = w_ref.shape[2]
    cdt = w_ref.dtype
    lin = _make_linear(w_ref, b_ref, w_idx, b_idx)

    # Flatten (bt, N, D) -> (bt*N, D) so every Linear gets a real M dimension.
    xc = xc_ref[...].reshape(bt * nc, x_dim)
    yc = yc_ref[...].reshape(bt * nc, y_dim)
    xt = xt_ref[...].reshape(bt * nt, x_dim)

    r = _encode_context(xc, yc, lin, w_ref, w_idx, y_dim, bt, nc,
                        with_self_attn=True)                       # (bt*nc, R)

    # mlp_x_target / mlp_x_context: Linear -> SiLU -> Linear
    qx = lin(xt, "wt1", "bt1", din=x_dim)
    qx = lin(jax.nn.silu(qx), "wt2", "bt2")                        # (bt*nt, R)
    kx = lin(xc, "wc1", "bc1", din=x_dim)
    kx = lin(jax.nn.silu(kx), "wc2", "bc2")                        # (bt*nc, R)

    # cross-attention: query = mlp(x_target), key = mlp(x_context), value = r
    q2 = lin(qx, "ca_wq", "ca_bq")
    k2 = lin(kx, "ca_wk", "ca_bk")
    v2 = lin(r, "ca_wv", "ca_bv")
    out = lin(_softmax_attention(q2, k2, v2, bt, nt, nc, cdt), "ca_wo", "ca_bo")

    # TODO(synk): a lane-dense (bt, nt*h_dim) store (per review) would need a
    # minor-dim merging reshape that Mosaic may reject at these shapes; the
    # (bt, nt, 32) store below is lane-masked but tiny.
    out_ref[...] = out.reshape(bt, nt, h_dim).astype(out_ref.dtype)


def _mean_kernel(xc_ref, yc_ref, w_ref, b_ref, out_ref, *, w_idx, b_idx):
    bt, nc, x_dim = xc_ref.shape
    _, _, y_dim = yc_ref.shape
    r_dim = w_ref.shape[2]
    lin = _make_linear(w_ref, b_ref, w_idx, b_idx)

    xc = xc_ref[...].reshape(bt * nc, x_dim)
    yc = yc_ref[...].reshape(bt * nc, y_dim)

    r = _encode_context(xc, yc, lin, w_ref, w_idx, y_dim, bt, nc,
                        with_self_attn=False)                      # (bt*nc, R)
    r = r.reshape(bt, nc, r_dim)
    # Store only the per-batch mean; broadcast over the target length outside.
    out_ref[...] = jnp.mean(r, axis=1, keepdims=True).astype(out_ref.dtype)


# --------------------------------- wrapper ----------------------------------

def _choose_batch_tile(batch, n_ctx, n_tgt, h_dim, *, rows_target=256,
                       vmem_budget_bytes=8 * 1024 * 1024):
    """Pick the batch tile: enough flattened rows to fill an MXU pass
    (128 v5e / 256 v6e,v7x), stay well under the scoped-VMEM limit on every
    generation (v7x: 64 MiB phys / 32 MiB scoped), and keep >= 2 parallel grid
    steps when possible so v7x's two TensorCores are both used."""
    bt = max(1, rows_target // max(n_ctx, n_tgt, 1))
    bt = min(bt, batch)
    if batch >= 2:
        bt = min(bt, max(1, batch // 2))

    def working_set(b):
        acts = 6 * b * (n_ctx + n_tgt) * h_dim * 4          # f32 activations
        scores = 2 * b * max(n_ctx, n_tgt) * n_ctx * 4      # f32 attention scores
        io = 4 * b * (n_ctx + n_tgt) * h_dim * 4            # double-buffered in/out
        return acts + scores + io

    while bt > 1 and working_set(bt) > vmem_budget_bytes:
        bt -= 1
    while batch % bt:
        bt -= 1
    return bt


def deterministic_encoder(x_context, y_context, x_target, w_stack, b_stack, *,
                          is_attentive):
    B, Nc, x_dim = x_context.shape
    _, _, y_dim = y_context.shape
    _, Nt, _ = x_target.shape
    h_dim = w_stack.shape[2]

    bt = _choose_batch_tile(B, Nc, Nt, h_dim)
    grid = (B // bt,)

    def seq_spec(n, d):
        return pl.BlockSpec((bt, n, d), lambda b: (b, 0, 0))

    w_spec = pl.BlockSpec(w_stack.shape, lambda b: (0, 0, 0))
    b_spec = pl.BlockSpec(b_stack.shape, lambda b: (0, 0, 0))
    cparams = pltpu.CompilerParams(
        dimension_semantics=("parallel",),
        vmem_limit_bytes=32 * 1024 * 1024,
    )

    if is_attentive:
        kernel = functools.partial(_attentive_kernel,
                                   w_idx=ATTN_W_IDX, b_idx=ATTN_B_IDX)
        return pl.pallas_call(
            kernel,
            out_shape=jax.ShapeDtypeStruct((B, Nt, h_dim), jnp.float32),
            grid=grid,
            in_specs=[seq_spec(Nc, x_dim), seq_spec(Nc, y_dim),
                      seq_spec(Nt, x_dim), w_spec, b_spec],
            out_specs=pl.BlockSpec((bt, Nt, h_dim), lambda b: (b, 0, 0)),
            compiler_params=cparams,
        )(x_context, y_context, x_target, w_stack, b_stack)

    kernel = functools.partial(_mean_kernel, w_idx=MEAN_W_IDX, b_idx=MEAN_B_IDX)
    r_mean = pl.pallas_call(
        kernel,
        out_shape=jax.ShapeDtypeStruct((B, 1, h_dim), jnp.float32),
        grid=grid,
        in_specs=[seq_spec(Nc, x_dim), seq_spec(Nc, y_dim), w_spec, b_spec],
        out_specs=pl.BlockSpec((bt, 1, h_dim), lambda b: (b, 0, 0)),
        compiler_params=cparams,
    )(x_context, y_context, w_stack, b_stack)
    return jnp.broadcast_to(r_mean, (B, Nt, h_dim))


# --------------------------- params & reference -----------------------------

PARAM_ORDER = [
    "w_in", "b_in", "w_m1", "b_m1", "w_m2", "b_m2",
    "sa_wq", "sa_bq", "sa_wk", "sa_bk", "sa_wv", "sa_bv", "sa_wo", "sa_bo",
    "w_po", "b_po",
    "wt1", "bt1", "wt2", "bt2",
    "wc1", "bc1", "wc2", "bc2",
    "ca_wq", "ca_bq", "ca_wk", "ca_bk", "ca_wv", "ca_bv", "ca_wo", "ca_bo",
]


def init_params(key, x_dim, y_dim, h_dim, r_dim):
    assert r_dim == h_dim, "cross_attn(embed_dim=h_dim) requires r_dim == h_dim"
    shapes = {
        "w_in": (x_dim + y_dim, h_dim), "b_in": (1, h_dim),
        "w_m1": (h_dim, h_dim), "b_m1": (1, h_dim),
        "w_m2": (h_dim, h_dim), "b_m2": (1, h_dim),
        "sa_wq": (h_dim, h_dim), "sa_bq": (1, h_dim),
        "sa_wk": (h_dim, h_dim), "sa_bk": (1, h_dim),
        "sa_wv": (h_dim, h_dim), "sa_bv": (1, h_dim),
        "sa_wo": (h_dim, h_dim), "sa_bo": (1, h_dim),
        "w_po": (h_dim, r_dim), "b_po": (1, r_dim),
        "wt1": (x_dim, r_dim), "bt1": (1, r_dim),
        "wt2": (r_dim, r_dim), "bt2": (1, r_dim),
        "wc1": (x_dim, r_dim), "bc1": (1, r_dim),
        "wc2": (r_dim, r_dim), "bc2": (1, r_dim),
        "ca_wq": (h_dim, h_dim), "ca_bq": (1, h_dim),
        "ca_wk": (h_dim, h_dim), "ca_bk": (1, h_dim),
        "ca_wv": (h_dim, h_dim), "ca_bv": (1, h_dim),
        "ca_wo": (h_dim, h_dim), "ca_bo": (1, h_dim),
    }
    keys = jax.random.split(key, len(PARAM_ORDER))
    return {n: 0.1 * jax.random.normal(k, shapes[n], jnp.float32)
            for n, k in zip(PARAM_ORDER, keys)}


def reference(x_context, y_context, x_target, p, is_attentive):
    def lin(x, w, b):
        return x @ w + b

    def attn(q, k, v):
        s = jnp.einsum("bqd,bkd->bqk", q * (float(q.shape[-1]) ** -0.5), k)
        return jnp.einsum("bqk,bkd->bqd", jax.nn.softmax(s, axis=-1), v)

    h = lin(jnp.concatenate([x_context, y_context], -1), p["w_in"], p["b_in"])
    h = lin(h, p["w_m1"], p["b_m1"])
    h = jax.nn.relu(h)
    h = lin(h, p["w_m2"], p["b_m2"])
    if is_attentive:
        q = lin(h, p["sa_wq"], p["sa_bq"])
        k = lin(h, p["sa_wk"], p["sa_bk"])
        v = lin(h, p["sa_wv"], p["sa_bv"])
        h = lin(attn(q, k, v), p["sa_wo"], p["sa_bo"])
    r = lin(h, p["w_po"], p["b_po"])
    if is_attentive:
        qx = lin(x_target, p["wt1"], p["bt1"])
        qx = lin(jax.nn.silu(qx), p["wt2"], p["bt2"])
        kx = lin(x_context, p["wc1"], p["bc1"])
        kx = lin(jax.nn.silu(kx), p["wc2"], p["bc2"])
        q2 = lin(qx, p["ca_wq"], p["ca_bq"])
        k2 = lin(kx, p["ca_wk"], p["ca_bk"])
        v2 = lin(r, p["ca_wv"], p["ca_bv"])
        return lin(attn(q2, k2, v2), p["ca_wo"], p["ca_bo"])
    r = jnp.mean(r, axis=1, keepdims=True)
    return jnp.broadcast_to(r, (r.shape[0], x_target.shape[1], r.shape[-1]))


# ---------------------------------- main -------------------------------------

if __name__ == "__main__":
    B, Nc, Nt = 2, 8, 8
    X_DIM, Y_DIM, H_DIM, R_DIM = 2, 1, 32, 32

    key = jax.random.PRNGKey(0)
    kx, ky, kt, kp = jax.random.split(key, 4)
    x_context = jax.random.normal(kx, (B, Nc, X_DIM), jnp.float32)
    y_context = jax.random.normal(ky, (B, Nc, Y_DIM), jnp.float32)
    x_target = jax.random.normal(kt, (B, Nt, X_DIM), jnp.float32)
    params = init_params(kp, X_DIM, Y_DIM, H_DIM, R_DIM)

    for is_attn in (True, False):
        ref = reference(x_context, y_context, x_target, params, is_attn)
        # bf16 matmul inputs are the recommended config on v6e/v7x (f32 also
        # checked); elementwise math is f32 in both cases (v5e-friendly).
        for compute_dtype, tol in ((jnp.bfloat16, 2e-2), (jnp.float32, 5e-3)):
            w_stack, b_stack = pack_params(params, X_DIM, is_attentive=is_attn,
                                           compute_dtype=compute_dtype)
            out = deterministic_encoder(x_context, y_context, x_target,
                                        w_stack, b_stack, is_attentive=is_attn)
            out = jax.block_until_ready(out)
            np.testing.assert_allclose(np.asarray(out), np.asarray(ref),
                                       rtol=tol, atol=tol)

    print("KERNEL_OK")
</pallas_src>

<mosaic_0001>
module attributes {stable_mosaic.version = 11 : i64} {
  func.func @_attentive_kernel(%arg0: i32, %arg1: memref<1x8x2xf32, #tpu.memory_space<vmem>>, %arg2: memref<1x8x1xf32, #tpu.memory_space<vmem>>, %arg3: memref<1x8x2xf32, #tpu.memory_space<vmem>>, %arg4: memref<17x32x32xbf16, #tpu.memory_space<vmem>>, %arg5: memref<16x1x32xf32, #tpu.memory_space<vmem>>, %arg6: memref<1x8x32xf32, #tpu.memory_space<vmem>>) attributes {dimension_semantics = [#tpu.dimension_semantics<parallel>], iteration_bounds = array<i64: 2>, scalar_prefetch = 0 : i64, scratch_operands = 0 : i64, tpu.core_type = #tpu.core_type<tc>, window_params = [{transform_indices = @transform_0, window_bounds = array<i64: 1, 8, 2>}, {transform_indices = @transform_1, window_bounds = array<i64: 1, 8, 1>}, {transform_indices = @transform_2, window_bounds = array<i64: 1, 8, 2>}, {pipeline_mode = #tpu.pipeline_mode<synchronous>, transform_indices = @transform_3, window_bounds = array<i64: 17, 32, 32>}, {pipeline_mode = #tpu.pipeline_mode<synchronous>, transform_indices = @transform_4, window_bounds = array<i64: 16, 1, 32>}, {transform_indices = @transform_5, window_bounds = array<i64: 1, 8, 32>}]} {
    %c0 = arith.constant 0 : index
    %c0_0 = arith.constant 0 : index
    %c0_1 = arith.constant 0 : index
    %0 = vector.load %arg1[%c0, %c0_0, %c0_1] : memref<1x8x2xf32, #tpu.memory_space<vmem>>, vector<1x8x2xf32>
    %1 = vector.shape_cast %0 : vector<1x8x2xf32> to vector<8x2xf32>
    %c0_2 = arith.constant 0 : index
    %c0_3 = arith.constant 0 : index
    %c0_4 = arith.constant 0 : index
    %2 = vector.load %arg2[%c0_2, %c0_3, %c0_4] : memref<1x8x1xf32, #tpu.memory_space<vmem>>, vector<1x8x1xf32>
    %3 = vector.shape_cast %2 : vector<1x8x1xf32> to vector<8x1xf32>
    %c0_5 = arith.constant 0 : index
    %c0_6 = arith.constant 0 : index
    %c0_7 = arith.constant 0 : index
    %4 = vector.load %arg3[%c0_5, %c0_6, %c0_7] : memref<1x8x2xf32, #tpu.memory_space<vmem>>, vector<1x8x2xf32>
    %5 = vector.shape_cast %4 : vector<1x8x2xf32> to vector<8x2xf32>
    %c0_8 = arith.constant 0 : index
    %c0_9 = arith.constant 0 : index
    %c0_10 = arith.constant 0 : index
    %6 = vector.load %arg4[%c0_8, %c0_9, %c0_10] : memref<17x32x32xbf16, #tpu.memory_space<vmem>>, vector<1x2x32xbf16>
    %7 = vector.shape_cast %6 : vector<1x2x32xbf16> to vector<2x32xbf16>
    %8 = arith.truncf %1 : vector<8x2xf32> to vector<8x2xbf16>
    %cst = arith.constant dense<0.000000e+00> : vector<8x32xf32>
    %9 = tpu.matmul %8, %7, %cst {dimension_numbers = #tpu.dot_dimension_numbers<[1], [0], [0], [1], [0, 0, 1, 1], [], []>} : vector<8x2xbf16>, vector<2x32xbf16>, vector<8x32xf32> -> vector<8x32xf32>
    %c0_11 = arith.constant 0 : index
    %c0_12 = arith.constant 0 : index
    %c0_13 = arith.constant 0 : index
    %10 = vector.load %arg5[%c0_11, %c0_12, %c0_13] : memref<16x1x32xf32, #tpu.memory_space<vmem>>, vector<1x1x32xf32>
    %11 = vector.shape_cast %10 : vector<1x1x32xf32> to vector<1x32xf32>
    %12 = vector.broadcast %11 : vector<1x32xf32> to vector<8x32xf32>
    %13 = arith.addf %9, %12 : vector<8x32xf32>
    %c1 = arith.constant 1 : index
    %c0_14 = arith.constant 0 : index
    %c0_15 = arith.constant 0 : index
    %14 = vector.load %arg4[%c1, %c0_14, %c0_15] : memref<17x32x32xbf16, #tpu.memory_space<vmem>>, vector<1x1x32xbf16>
    %15 = vector.shape_cast %14 : vector<1x1x32xbf16> to vector<1x32xbf16>
    %16 = arith.extf %15 : vector<1x32xbf16> to vector<1x32xf32>
    %17 = vector.broadcast %3 : vector<8x1xf32> to vector<8x32xf32>
    %18 = vector.broadcast %16 : vector<1x32xf32> to vector<8x32xf32>
    %19 = arith.mulf %17, %18 : vector<8x32xf32>
    %20 = arith.addf %13, %19 : vector<8x32xf32>
    %c2 = arith.constant 2 : index
    %c0_16 = arith.constant 0 : index
    %c0_17 = arith.constant 0 : index
    %21 = vector.load %arg4[%c2, %c0_16, %c0_17] : memref<17x32x32xbf16, #tpu.memory_space<vmem>>, vector<1x32x32xbf16>
    %22 = vector.shape_cast %21 : vector<1x32x32xbf16> to vector<32x32xbf16>
    %23 = arith.truncf %20 : vector<8x32xf32> to vector<8x32xbf16>
    %cst_18 = arith.constant dense<0.000000e+00> : vector<8x32xf32>
    %24 = tpu.matmul %23, %22, %cst_18 {dimension_numbers = #tpu.dot_dimension_numbers<[1], [0], [0], [1], [0, 0, 1, 1], [], []>} : vector<8x32xbf16>, vector<32x32xbf16>, vector<8x32xf32> -> vector<8x32xf32>
    %c1_19 = arith.constant 1 : index
    %c0_20 = arith.constant 0 : index
    %c0_21 = arith.constant 0 : index
    %25 = vector.load %arg5[%c1_19, %c0_20, %c0_21] : memref<16x1x32xf32, #tpu.memory_space<vmem>>, vector<1x1x32xf32>
    %26 = vector.shape_cast %25 : vector<1x1x32xf32> to vector<1x32xf32>
    %27 = vector.broadcast %26 : vector<1x32xf32> to vector<8x32xf32>
    %28 = arith.addf %24, %27 : vector<8x32xf32>
    %cst_22 = arith.constant 0.000000e+00 : f32
    %29 = vector.broadcast %cst_22 : f32 to vector<8x32xf32>
    %30 = arith.maximumf %28, %29 : vector<8x32xf32>
    %c3 = arith.constant 3 : index
    %c0_23 = arith.constant 0 : index
    %c0_24 = arith.constant 0 : index
    %31 = vector.load %arg4[%c3, %c0_23, %c0_24] : memref<17x32x32xbf16, #tpu.memory_space<vmem>>, vector<1x32x32xbf16>
    %32 = vector.shape_cast %31 : vector<1x32x32xbf16> to vector<32x32xbf16>
    %33 = arith.truncf %30 : vector<8x32xf32> to vector<8x32xbf16>
    %cst_25 = arith.constant dense<0.000000e+00> : vector<8x32xf32>
    %34 = tpu.matmul %33, %32, %cst_25 {dimension_numbers = #tpu.dot_dimension_numbers<[1], [0], [0], [1], [0, 0, 1, 1], [], []>} : vector<8x32xbf16>, vector<32x32xbf16>, vector<8x32xf32> -> vector<8x32xf32>
    %c2_26 = arith.constant 2 : index
    %c0_27 = arith.constant 0 : index
    %c0_28 = arith.constant 0 : index
    %35 = vector.load %arg5[%c2_26, %c0_27, %c0_28] : memref<16x1x32xf32, #tpu.memory_space<vmem>>, vector<1x1x32xf32>
    %36 = vector.shape_cast %35 : vector<1x1x32xf32> to vector<1x32xf32>
    %37 = vector.broadcast %36 : vector<1x32xf32> to vector<8x32xf32>
    %38 = arith.addf %34, %37 : vector<8x32xf32>
    %c4 = arith.constant 4 : index
    %c0_29 = arith.constant 0 : index
    %c0_30 = arith.constant 0 : index
    %39 = vector.load %arg4[%c4, %c0_29, %c0_30] : memref<17x32x32xbf16, #tpu.memory_space<vmem>>, vector<1x32x32xbf16>
    %40 = vector.shape_cast %39 : vector<1x32x32xbf16> to vector<32x32xbf16>
    %41 = arith.truncf %38 : vector<8x32xf32> to vector<8x32xbf16>
    %cst_31 = arith.constant dense<0.000000e+00> : vector<8x32xf32>
    %42 = tpu.matmul %41, %40, %cst_31 {dimension_numbers = #tpu.dot_dimension_numbers<[1], [0], [0], [1], [0, 0, 1, 1], [], []>} : vector<8x32xbf16>, vector<32x32xbf16>, vector<8x32xf32> -> vector<8x32xf32>
    %c3_32 = arith.constant 3 : index
    %c0_33 = arith.constant 0 : index
    %c0_34 = arith.constant 0 : index
    %43 = vector.load %arg5[%c3_32, %c0_33, %c0_34] : memref<16x1x32xf32, #tpu.memory_space<vmem>>, vector<1x1x32xf32>
    %44 = vector.shape_cast %43 : vector<1x1x32xf32> to vector<1x32xf32>
    %45 = vector.broadcast %44 : vector<1x32xf32> to vector<8x32xf32>
    %46 = arith.addf %42, %45 : vector<8x32xf32>
    %c5 = arith.constant 5 : index
    %c0_35 = arith.constant 0 : index
    %c0_36 = arith.constant 0 : index
    %47 = vector.load %arg4[%c5, %c0_35, %c0_36] : memref<17x32x32xbf16, #tpu.memory_space<vmem>>, vector<1x32x32xbf16>
    %48 = vector.shape_cast %47 : vector<1x32x32xbf16> to vector<32x32xbf16>
    %49 = arith.truncf %38 : vector<8x32xf32> to vector<8x32xbf16>
    %cst_37 = arith.constant dense<0.000000e+00> : vector<8x32xf32>
    %50 = tpu.matmul %49, %48, %cst_37 {dimension_numbers = #tpu.dot_dimension_numbers<[1], [0], [0], [1], [0, 0, 1, 1], [], []>} : vector<8x32xbf16>, vector<32x32xbf16>, vector<8x32xf32> -> vector<8x32xf32>
    %c4_38 = arith.constant 4 : index
    %c0_39 = arith.constant 0 : index
    %c0_40 = arith.constant 0 : index
    %51 = vector.load %arg5[%c4_38, %c0_39, %c0_40] : memref<16x1x32xf32, #tpu.memory_space<vmem>>, vector<1x1x32xf32>
    %52 = vector.shape_cast %51 : vector<1x1x32xf32> to vector<1x32xf32>
    %53 = vector.broadcast %52 : vector<1x32xf32> to vector<8x32xf32>
    %54 = arith.addf %50, %53 : vector<8x32xf32>
    %c6 = arith.constant 6 : index
    %c0_41 = arith.constant 0 : index
    %c0_42 = arith.constant 0 : index
    %55 = vector.load %arg4[%c6, %c0_41, %c0_42] : memref<17x32x32xbf16, #tpu.memory_space<vmem>>, vector<1x32x32xbf16>
    %56 = vector.shape_cast %55 : vector<1x32x32xbf16> to vector<32x32xbf16>
    %57 = arith.truncf %38 : vector<8x32xf32> to vector<8x32xbf16>
    %cst_43 = arith.constant dense<0.000000e+00> : vector<8x32xf32>
    %58 = tpu.matmul %57, %56, %cst_43 {dimension_numbers = #tpu.dot_dimension_numbers<[1], [0], [0], [1], [0, 0, 1, 1], [], []>} : vector<8x32xbf16>, vector<32x32xbf16>, vector<8x32xf32> -> vector<8x32xf32>
    %c5_44 = arith.constant 5 : index
    %c0_45 = arith.constant 0 : index
    %c0_46 = arith.constant 0 : index
    %59 = vector.load %arg5[%c5_44, %c0_45, %c0_46] : memref<16x1x32xf32, #tpu.memory_space<vmem>>, vector<1x1x32xf32>
    %60 = vector.shape_cast %59 : vector<1x1x32xf32> to vector<1x32xf32>
    %61 = vector.broadcast %60 : vector<1x32xf32> to vector<8x32xf32>
    %62 = arith.addf %58, %61 : vector<8x32xf32>
    %63 = vector.shape_cast %46 : vector<8x32xf32> to vector<1x8x32xf32>
    %64 = vector.shape_cast %54 : vector<8x32xf32> to vector<1x8x32xf32>
    %65 = vector.shape_cast %62 : vector<8x32xf32> to vector<1x8x32xf32>
    %cst_47 = arith.constant 0.176776692 : f32
    %66 = vector.broadcast %cst_47 : f32 to vector<1x8x32xf32>
    %67 = arith.mulf %63, %66 : vector<1x8x32xf32>
    %68 = arith.truncf %67 : vector<1x8x32xf32> to vector<1x8x32xbf16>
    %69 = arith.truncf %64 : vector<1x8x32xf32> to vector<1x8x32xbf16>
    "tpu.trace_start"() <{level = 10 : i32, message = "bqd,bkd->bqk"}> : () -> ()
    %cst_48 = arith.constant dense<0.000000e+00> : vector<1x8x8xf32>
    %70 = tpu.matmul %68, %69, %cst_48 {dimension_numbers = #tpu.dot_dimension_numbers<[2], [2], [1], [1], [0, 0, 0, 1, 1, 1], [0], [0]>} : vector<1x8x32xbf16>, vector<1x8x32xbf16>, vector<1x8x8xf32> -> vector<1x8x8xf32>
    "tpu.trace_stop"() : () -> ()
    %cst_49 = arith.constant dense<0xFF800000> : vector<1x8xf32>
    %71 = vector.multi_reduction <maximumf>, %70, %cst_49 [2] : vector<1x8x8xf32> to vector<1x8xf32>
    %72 = vector.shape_cast %71 : vector<1x8xf32> to vector<1x8x1xf32>
    %73 = vector.broadcast %72 : vector<1x8x1xf32> to vector<1x8x8xf32>
    %74 = arith.subf %70, %73 : vector<1x8x8xf32>
    %75 = math.exp %74 : vector<1x8x8xf32>
    %cst_50 = arith.constant dense<0.000000e+00> : vector<1x8xf32>
    %76 = vector.multi_reduction <add>, %75, %cst_50 [2] : vector<1x8x8xf32> to vector<1x8xf32>
    %77 = vector.shape_cast %76 : vector<1x8xf32> to vector<1x8x1xf32>
    %78 = tpu.reciprocal %77 {approx = true} : vector<1x8x1xf32> -> vector<1x8x1xf32>
    %79 = vector.broadcast %78 : vector<1x8x1xf32> to vector<1x8x8xf32>
    %80 = arith.mulf %75, %79 : vector<1x8x8xf32>
    %81 = arith.truncf %80 : vector<1x8x8xf32> to vector<1x8x8xbf16>
    %82 = arith.truncf %65 : vector<1x8x32xf32> to vector<1x8x32xbf16>
    "tpu.trace_start"() <{level = 10 : i32, message = "bqk,bkd->bqd"}> : () -> ()
    %cst_51 = arith.constant dense<0.000000e+00> : vector<1x8x32xf32>
    %83 = tpu.matmul %81, %82, %cst_51 {dimension_numbers = #tpu.dot_dimension_numbers<[2], [1], [1], [2], [0, 0, 0, 1, 1, 2], [0], [0]>} : vector<1x8x8xbf16>, vector<1x8x32xbf16>, vector<1x8x32xf32> -> vector<1x8x32xf32>
    "tpu.trace_stop"() : () -> ()
    %84 = vector.shape_cast %83 : vector<1x8x32xf32> to vector<8x32xf32>
    %c7 = arith.constant 7 : index
    %c0_52 = arith.constant 0 : index
    %c0_53 = arith.constant 0 : index
    %85 = vector.load %arg4[%c7, %c0_52, %c0_53] : memref<17x32x32xbf16, #tpu.memory_space<vmem>>, vector<1x32x32xbf16>
    %86 = vector.shape_cast %85 : vector<1x32x32xbf16> to vector<32x32xbf16>
    %87 = arith.truncf %84 : vector<8x32xf32> to vector<8x32xbf16>
    %cst_54 = arith.constant dense<0.000000e+00> : vector<8x32xf32>
    %88 = tpu.matmul %87, %86, %cst_54 {dimension_numbers = #tpu.dot_dimension_numbers<[1], [0], [0], [1], [0, 0, 1, 1], [], []>} : vector<8x32xbf16>, vector<32x32xbf16>, vector<8x32xf32> -> vector<8x32xf32>
    %c6_55 = arith.constant 6 : index
    %c0_56 = arith.constant 0 : index
    %c0_57 = arith.constant 0 : index
    %89 = vector.load %arg5[%c6_55, %c0_56, %c0_57] : memref<16x1x32xf32, #tpu.memory_space<vmem>>, vector<1x1x32xf32>
    %90 = vector.shape_cast %89 : vector<1x1x32xf32> to vector<1x32xf32>
    %91 = vector.broadcast %90 : vector<1x32xf32> to vector<8x32xf32>
    %92 = arith.addf %88, %91 : vector<8x32xf32>
    %c8 = arith.constant 8 : index
    %c0_58 = arith.constant 0 : index
    %c0_59 = arith.constant 0 : index
    %93 = vector.load %arg4[%c8, %c0_58, %c0_59] : memref<17x32x32xbf16, #tpu.memory_space<vmem>>, vector<1x32x32xbf16>
    %94 = vector.shape_cast %93 : vector<1x32x32xbf16> to vector<32x32xbf16>
    %95 = arith.truncf %92 : vector<8x32xf32> to vector<8x32xbf16>
    %cst_60 = arith.constant dense<0.000000e+00> : vector<8x32xf32>
    %96 = tpu.matmul %95, %94, %cst_60 {dimension_numbers = #tpu.dot_dimension_numbers<[1], [0], [0], [1], [0, 0, 1, 1], [], []>} : vector<8x32xbf16>, vector<32x32xbf16>, vector<8x32xf32> -> vector<8x32xf32>
    %c7_61 = arith.constant 7 : index
    %c0_62 = arith.constant 0 : index
    %c0_63 = arith.constant 0 : index
    %97 = vector.load %arg5[%c7_61, %c0_62, %c0_63] : memref<16x1x32xf32, #tpu.memory_space<vmem>>, vector<1x1x32xf32>
    %98 = vector.shape_cast %97 : vector<1x1x32xf32> to vector<1x32xf32>
    %99 = vector.broadcast %98 : vector<1x32xf32> to vector<8x32xf32>
    %100 = arith.addf %96, %99 : vector<8x32xf32>
    %c9 = arith.constant 9 : index
    %c0_64 = arith.constant 0 : index
    %c0_65 = arith.constant 0 : index
    %101 = vector.load %arg4[%c9, %c0_64, %c0_65] : memref<17x32x32xbf16, #tpu.memory_space<vmem>>, vector<1x2x32xbf16>
    %102 = vector.shape_cast %101 : vector<1x2x32xbf16> to vector<2x32xbf16>
    %103 = arith.truncf %5 : vector<8x2xf32> to vector<8x2xbf16>
    %cst_66 = arith.constant dense<0.000000e+00> : vector<8x32xf32>
    %104 = tpu.matmul %103, %102, %cst_66 {dimension_numbers = #tpu.dot_dimension_numbers<[1], [0], [0], [1], [0, 0, 1, 1], [], []>} : vector<8x2xbf16>, vector<2x32xbf16>, vector<8x32xf32> -> vector<8x32xf32>
    %c8_67 = arith.constant 8 : index
    %c0_68 = arith.constant 0 : index
    %c0_69 = arith.constant 0 : index
    %105 = vector.load %arg5[%c8_67, %c0_68, %c0_69] : memref<16x1x32xf32, #tpu.memory_space<vmem>>, vector<1x1x32xf32>
    %106 = vector.shape_cast %105 : vector<1x1x32xf32> to vector<1x32xf32>
    %107 = vector.broadcast %106 : vector<1x32xf32> to vector<8x32xf32>
    %108 = arith.addf %104, %107 : vector<8x32xf32>
    %109 = arith.negf %108 : vector<8x32xf32>
    %110 = math.exp %109 : vector<8x32xf32>
    %cst_70 = arith.constant 1.000000e+00 : f32
    %111 = vector.broadcast %cst_70 : f32 to vector<8x32xf32>
    %112 = arith.addf %111, %110 : vector<8x32xf32>
    %113 = arith.divf %111, %112 : vector<8x32xf32>
    %114 = arith.mulf %108, %113 : vector<8x32xf32>
    %c10 = arith.constant 10 : index
    %c0_71 = arith.constant 0 : index
    %c0_72 = arith.constant 0 : index
    %115 = vector.load %arg4[%c10, %c0_71, %c0_72] : memref<17x32x32xbf16, #tpu.memory_space<vmem>>, vector<1x32x32xbf16>
    %116 = vector.shape_cast %115 : vector<1x32x32xbf16> to vector<32x32xbf16>
    %117 = arith.truncf %114 : vector<8x32xf32> to vector<8x32xbf16>
    %cst_73 = arith.constant dense<0.000000e+00> : vector<8x32xf32>
    %118 = tpu.matmul %117, %116, %cst_73 {dimension_numbers = #tpu.dot_dimension_numbers<[1], [0], [0], [1], [0, 0, 1, 1], [], []>} : vector<8x32xbf16>, vector<32x32xbf16>, vector<8x32xf32> -> vector<8x32xf32>
    %c9_74 = arith.constant 9 : index
    %c0_75 = arith.constant 0 : index
    %c0_76 = arith.constant 0 : index
    %119 = vector.load %arg5[%c9_74, %c0_75, %c0_76] : memref<16x1x32xf32, #tpu.memory_space<vmem>>, vector<1x1x32xf32>
    %120 = vector.shape_cast %119 : vector<1x1x32xf32> to vector<1x32xf32>
    %121 = vector.broadcast %120 : vector<1x32xf32> to vector<8x32xf32>
    %122 = arith.addf %118, %121 : vector<8x32xf32>
    %c11 = arith.constant 11 : index
    %c0_77 = arith.constant 0 : index
    %c0_78 = arith.constant 0 : index
    %123 = vector.load %arg4[%c11, %c0_77, %c0_78] : memref<17x32x32xbf16, #tpu.memory_space<vmem>>, vector<1x2x32xbf16>
    %124 = vector.shape_cast %123 : vector<1x2x32xbf16> to vector<2x32xbf16>
    %125 = arith.truncf %1 : vector<8x2xf32> to vector<8x2xbf16>
    %cst_79 = arith.constant dense<0.000000e+00> : vector<8x32xf32>
    %126 = tpu.matmul %125, %124, %cst_79 {dimension_numbers = #tpu.dot_dimension_numbers<[1], [0], [0], [1], [0, 0, 1, 1], [], []>} : vector<8x2xbf16>, vector<2x32xbf16>, vector<8x32xf32> -> vector<8x32xf32>
    %c10_80 = arith.constant 10 : index
    %c0_81 = arith.constant 0 : index
    %c0_82 = arith.constant 0 : index
    %127 = vector.load %arg5[%c10_80, %c0_81, %c0_82] : memref<16x1x32xf32, #tpu.memory_space<vmem>>, vector<1x1x32xf32>
    %128 = vector.shape_cast %127 : vector<1x1x32xf32> to vector<1x32xf32>
    %129 = vector.broadcast %128 : vector<1x32xf32> to vector<8x32xf32>
    %130 = arith.addf %126, %129 : vector<8x32xf32>
    %131 = arith.negf %130 : vector<8x32xf32>
    %132 = math.exp %131 : vector<8x32xf32>
    %cst_83 = arith.constant 1.000000e+00 : f32
    %133 = vector.broadcast %cst_83 : f32 to vector<8x32xf32>
    %134 = arith.addf %133, %132 : vector<8x32xf32>
    %135 = arith.divf %133, %134 : vector<8x32xf32>
    %136 = arith.mulf %130, %135 : vector<8x32xf32>
    %c12 = arith.constant 12 : index
    %c0_84 = arith.constant 0 : index
    %c0_85 = arith.constant 0 : index
    %137 = vector.load %arg4[%c12, %c0_84, %c0_85] : memref<17x32x32xbf16, #tpu.memory_space<vmem>>, vector<1x32x32xbf16>
    %138 = vector.shape_cast %137 : vector<1x32x32xbf16> to vector<32x32xbf16>
    %139 = arith.truncf %136 : vector<8x32xf32> to vector<8x32xbf16>
    %cst_86 = arith.constant dense<0.000000e+00> : vector<8x32xf32>
    %140 = tpu.matmul %139, %138, %cst_86 {dimension_numbers = #tpu.dot_dimension_numbers<[1], [0], [0], [1], [0, 0, 1, 1], [], []>} : vector<8x32xbf16>, vector<32x32xbf16>, vector<8x32xf32> -> vector<8x32xf32>
    %c11_87 = arith.constant 11 : index
    %c0_88 = arith.constant 0 : index
    %c0_89 = arith.constant 0 : index
    %141 = vector.load %arg5[%c11_87, %c0_88, %c0_89] : memref<16x1x32xf32, #tpu.memory_space<vmem>>, vector<1x1x32xf32>
    %142 = vector.shape_cast %141 : vector<1x1x32xf32> to vector<1x32xf32>
    %143 = vector.broadcast %142 : vector<1x32xf32> to vector<8x32xf32>
    %144 = arith.addf %140, %143 : vector<8x32xf32>
    %c13 = arith.constant 13 : index
    %c0_90 = arith.constant 0 : index
    %c0_91 = arith.constant 0 : index
    %145 = vector.load %arg4[%c13, %c0_90, %c0_91] : memref<17x32x32xbf16, #tpu.memory_space<vmem>>, vector<1x32x32xbf16>
    %146 = vector.shape_cast %145 : vector<1x32x32xbf16> to vector<32x32xbf16>
    %147 = arith.truncf %122 : vector<8x32xf32> to vector<8x32xbf16>
    %cst_92 = arith.constant dense<0.000000e+00> : vector<8x32xf32>
    %148 = tpu.matmul %147, %146, %cst_92 {dimension_numbers = #tpu.dot_dimension_numbers<[1], [0], [0], [1], [0, 0, 1, 1], [], []>} : vector<8x32xbf16>, vector<32x32xbf16>, vector<8x32xf32> -> vector<8x32xf32>
    %c12_93 = arith.constant 12 : index
    %c0_94 = arith.constant 0 : index
    %c0_95 = arith.constant 0 : index
    %149 = vector.load %arg5[%c12_93, %c0_94, %c0_95] : memref<16x1x32xf32, #tpu.memory_space<vmem>>, vector<1x1x32xf32>
    %150 = vector.shape_cast %149 : vector<1x1x32xf32> to vector<1x32xf32>
    %151 = vector.broadcast %150 : vector<1x32xf32> to vector<8x32xf32>
    %152 = arith.addf %148, %151 : vector<8x32xf32>
    %c14 = arith.constant 14 : index
    %c0_96 = arith.constant 0 : index
    %c0_97 = arith.constant 0 : index
    %153 = vector.load %arg4[%c14, %c0_96, %c0_97] : memref<17x32x32xbf16, #tpu.memory_space<vmem>>, vector<1x32x32xbf16>
    %154 = vector.shape_cast %153 : vector<1x32x32xbf16> to vector<32x32xbf16>
    %155 = arith.truncf %144 : vector<8x32xf32> to vector<8x32xbf16>
    %cst_98 = arith.constant dense<0.000000e+00> : vector<8x32xf32>
    %156 = tpu.matmul %155, %154, %cst_98 {dimension_numbers = #tpu.dot_dimension_numbers<[1], [0], [0], [1], [0, 0, 1, 1], [], []>} : vector<8x32xbf16>, vector<32x32xbf16>, vector<8x32xf32> -> vector<8x32xf32>
    %c13_99 = arith.constant 13 : index
    %c0_100 = arith.constant 0 : index
    %c0_101 = arith.constant 0 : index
    %157 = vector.load %arg5[%c13_99, %c0_100, %c0_101] : memref<16x1x32xf32, #tpu.memory_space<vmem>>, vector<1x1x32xf32>
    %158 = vector.shape_cast %157 : vector<1x1x32xf32> to vector<1x32xf32>
    %159 = vector.broadcast %158 : vector<1x32xf32> to vector<8x32xf32>
    %160 = arith.addf %156, %159 : vector<8x32xf32>
    %c15 = arith.constant 15 : index
    %c0_102 = arith.constant 0 : index
    %c0_103 = arith.constant 0 : index
    %161 = vector.load %arg4[%c15, %c0_102, %c0_103] : memref<17x32x32xbf16, #tpu.memory_space<vmem>>, vector<1x32x32xbf16>
    %162 = vector.shape_cast %161 : vector<1x32x32xbf16> to vector<32x32xbf16>
    %163 = arith.truncf %100 : vector<8x32xf32> to vector<8x32xbf16>
    %cst_104 = arith.constant dense<0.000000e+00> : vector<8x32xf32>
    %164 = tpu.matmul %163, %162, %cst_104 {dimension_numbers = #tpu.dot_dimension_numbers<[1], [0], [0], [1], [0, 0, 1, 1], [], []>} : vector<8x32xbf16>, vector<32x32xbf16>, vector<8x32xf32> -> vector<8x32xf32>
    %c14_105 = arith.constant 14 : index
    %c0_106 = arith.constant 0 : index
    %c0_107 = arith.constant 0 : index
    %165 = vector.load %arg5[%c14_105, %c0_106, %c0_107] : memref<16x1x32xf32, #tpu.memory_space<vmem>>, vector<1x1x32xf32>
    %166 = vector.shape_cast %165 : vector<1x1x32xf32> to vector<1x32xf32>
    %167 = vector.broadcast %166 : vector<1x32xf32> to vector<8x32xf32>
    %168 = arith.addf %164, %167 : vector<8x32xf32>
    %169 = vector.shape_cast %152 : vector<8x32xf32> to vector<1x8x32xf32>
    %170 = vector.shape_cast %160 : vector<8x32xf32> to vector<1x8x32xf32>
    %171 = vector.shape_cast %168 : vector<8x32xf32> to vector<1x8x32xf32>
    %cst_108 = arith.constant 0.176776692 : f32
    %172 = vector.broadcast %cst_108 : f32 to vector<1x8x32xf32>
    %173 = arith.mulf %169, %172 : vector<1x8x32xf32>
    %174 = arith.truncf %173 : vector<1x8x32xf32> to vector<1x8x32xbf16>
    %175 = arith.truncf %170 : vector<1x8x32xf32> to vector<1x8x32xbf16>
    "tpu.trace_start"() <{level = 10 : i32, message = "bqd,bkd->bqk"}> : () -> ()
    %cst_109 = arith.constant dense<0.000000e+00> : vector<1x8x8xf32>
    %176 = tpu.matmul %174, %175, %cst_109 {dimension_numbers = #tpu.dot_dimension_numbers<[2], [2], [1], [1], [0, 0, 0, 1, 1, 1], [0], [0]>} : vector<1x8x32xbf16>, vector<1x8x32xbf16>, vector<1x8x8xf32> -> vector<1x8x8xf32>
    "tpu.trace_stop"() : () -> ()
    %cst_110 = arith.constant dense<0xFF800000> : vector<1x8xf32>
    %177 = vector.multi_reduction <maximumf>, %176, %cst_110 [2] : vector<1x8x8xf32> to vector<1x8xf32>
    %178 = vector.shape_cast %177 : vector<1x8xf32> to vector<1x8x1xf32>
    %179 = vector.broadcast %178 : vector<1x8x1xf32> to vector<1x8x8xf32>
    %180 = arith.subf %176, %179 : vector<1x8x8xf32>
    %181 = math.exp %180 : vector<1x8x8xf32>
    %cst_111 = arith.constant dense<0.000000e+00> : vector<1x8xf32>
    %182 = vector.multi_reduction <add>, %181, %cst_111 [2] : vector<1x8x8xf32> to vector<1x8xf32>
    %183 = vector.shape_cast %182 : vector<1x8xf32> to vector<1x8x1xf32>
    %184 = tpu.reciprocal %183 {approx = true} : vector<1x8x1xf32> -> vector<1x8x1xf32>
    %185 = vector.broadcast %184 : vector<1x8x1xf32> to vector<1x8x8xf32>
    %186 = arith.mulf %181, %185 : vector<1x8x8xf32>
    %187 = arith.truncf %186 : vector<1x8x8xf32> to vector<1x8x8xbf16>
    %188 = arith.truncf %171 : vector<1x8x32xf32> to vector<1x8x32xbf16>
    "tpu.trace_start"() <{level = 10 : i32, message = "bqk,bkd->bqd"}> : () -> ()
    %cst_112 = arith.constant dense<0.000000e+00> : vector<1x8x32xf32>
    %189 = tpu.matmul %187, %188, %cst_112 {dimension_numbers = #tpu.dot_dimension_numbers<[2], [1], [1], [2], [0, 0, 0, 1, 1, 2], [0], [0]>} : vector<1x8x8xbf16>, vector<1x8x32xbf16>, vector<1x8x32xf32> -> vector<1x8x32xf32>
    "tpu.trace_stop"() : () -> ()
    %190 = vector.shape_cast %189 : vector<1x8x32xf32> to vector<8x32xf32>
    %c16 = arith.constant 16 : index
    %c0_113 = arith.constant 0 : index
    %c0_114 = arith.constant 0 : index
    %191 = vector.load %arg4[%c16, %c0_113, %c0_114] : memref<17x32x32xbf16, #tpu.memory_space<vmem>>, vector<1x32x32xbf16>
    %192 = vector.shape_cast %191 : vector<1x32x32xbf16> to vector<32x32xbf16>
    %193 = arith.truncf %190 : vector<8x32xf32> to vector<8x32xbf16>
    %cst_115 = arith.constant dense<0.000000e+00> : vector<8x32xf32>
    %194 = tpu.matmul %193, %192, %cst_115 {dimension_numbers = #tpu.dot_dimension_numbers<[1], [0], [0], [1], [0, 0, 1, 1], [], []>} : vector<8x32xbf16>, vector<32x32xbf16>, vector<8x32xf32> -> vector<8x32xf32>
    %c15_116 = arith.constant 15 : index
    %c0_117 = arith.constant 0 : index
    %c0_118 = arith.constant 0 : index
    %195 = vector.load %arg5[%c15_116, %c0_117, %c0_118] : memref<16x1x32xf32, #tpu.memory_space<vmem>>, vector<1x1x32xf32>
    %196 = vector.shape_cast %195 : vector<1x1x32xf32> to vector<1x32xf32>
    %197 = vector.broadcast %196 : vector<1x32xf32> to vector<8x32xf32>
    %198 = arith.addf %194, %197 : vector<8x32xf32>
    %199 = vector.shape_cast %198 : vector<8x32xf32> to vector<1x8x32xf32>
    %c0_119 = arith.constant 0 : index
    %c0_120 = arith.constant 0 : index
    %c0_121 = arith.constant 0 : index
    %200 = vector.load %arg6[%c0_119, %c0_120, %c0_121] : memref<1x8x32xf32, #tpu.memory_space<vmem>>, vector<1x8x32xf32>
    tpu.vector_store %arg6[%c0_119, %c0_120, %c0_121], %199 {strides = array<i32>} : memref<1x8x32xf32, #tpu.memory_space<vmem>>, vector<1x8x32xf32>,
    return
  }
  func.func @transform_0(%arg0: i32) -> (i32, i32, i32) {
    %c0_i32 = arith.constant 0 : i32
    %c0_i32_0 = arith.constant 0 : i32
    %c0_i32_1 = arith.constant 0 : i32
    return %arg0, %c0_i32, %c0_i32_0 : i32, i32, i32
  }
  func.func @transform_1(%arg0: i32) -> (i32, i32, i32) {
    %c0_i32 = arith.constant 0 : i32
    %c0_i32_0 = arith.constant 0 : i32
    %c0_i32_1 = arith.constant 0 : i32
    return %arg0, %c0_i32, %c0_i32_0 : i32, i32, i32
  }
  func.func @transform_2(%arg0: i32) -> (i32, i32, i32) {
    %c0_i32 = arith.constant 0 : i32
    %c0_i32_0 = arith.constant 0 : i32
    %c0_i32_1 = arith.constant 0 : i32
    return %arg0, %c0_i32, %c0_i32_0 : i32, i32, i32
  }
  func.func @transform_3(%arg0: i32) -> (i32, i32, i32) {
    %c0_i32 = arith.constant 0 : i32
    %c0_i32_0 = arith.constant 0 : i32
    %c0_i32_1 = arith.constant 0 : i32
    %c0_i32_2 = arith.constant 0 : i32
    return %c0_i32, %c0_i32_0, %c0_i32_1 : i32, i32, i32
  }
  func.func @transform_4(%arg0: i32) -> (i32, i32, i32) {
    %c0_i32 = arith.constant 0 : i32
    %c0_i32_0 = arith.constant 0 : i32
    %c0_i32_1 = arith.constant 0 : i32
    %c0_i32_2 = arith.constant 0 : i32
    return %c0_i32, %c0_i32_0, %c0_i32_1 : i32, i32, i32
  }
  func.func @transform_5(%arg0: i32) -> (i32, i32, i32) {
    %c0_i32 = arith.constant 0 : i32
    %c0_i32_0 = arith.constant 0 : i32
    %c0_i32_1 = arith.constant 0 : i32
    return %arg0, %c0_i32, %c0_i32_0 : i32, i32, i32
  }
}

</mosaic_0001>

<llo_original>
// kernel: tpu_custom_call.1
$region0: #{tpu_custom_call.1}
  #allocation0 [shape = 'u32[]', space=smem, size = 0x4, offset = 0x4, fixed_abs, tag = 'smem constant byte address 0x4 - core index']
  #allocation1 [shape = 'u32[144,128]{1,0:T(1,128)}', space=vmem, size = 0x12000, scoped, tag = 'internal scratch']
  %s0 = inlined_call_operand.vmem [shape: f32[2,8,2], index: 0, kind: input, shape index: {}]
  %s1 = inlined_call_operand.vmem [shape: f32[2,8,1], index: 1, kind: input, shape index: {}]
  %s2 = inlined_call_operand.vmem [shape: f32[2,8,2], index: 2, kind: input, shape index: {}]
  %s3 = inlined_call_operand.hbm [shape: bf16[17,32,32], index: 3, kind: input, shape index: {}]
  %s4 = inlined_call_operand.vmem [shape: f32[16,1,32], index: 4, kind: input, shape index: {}]
  %s5 = inlined_call_operand.hbm [shape: f32[2,8,32], index: 5, kind: output, shape index: {}]
  %s6 = sld [smem:[#allocation0]]
  $region57: #{tpu_custom_call.1} parent=0
    _
  %s8 = ssub.s32 1, %s6
  %s9 = scalar_select 0, %s8, %s6
  $region1: #{tpu_custom_call.1} parent=0
    #allocation2 [shape = 'u8[139264]{0}', space=vmem, size = 0x22000, scoped, tag = 'input window, operand 3, single buffered']
    #allocation3 [shape = 's32[2]{0}', space=sflag, size = 0x8, scoped, tag = 'scoped memory for tpu_custom_call.1']
    #allocation4 [shape = 's32[2]{0}', space=sflag, size = 0x8, scoped, tag = 'scoped memory for tpu_custom_call.1']
    #allocation5 [shape = 'u8[8192]{0}', space=vmem, size = 0x2000, scoped, tag = 'output window, operand 0']
    %10 = vsyncpa [#allocation3], 0
    %11 = vsyncpa [#allocation4], 0
    %s12 = scalar_lea.sflag [#allocation4], 1
    %13 = vsyncpa %s12, 0
    loop: start=0, step=1, limit=4
    $region2: #{tpu_custom_call.1} parent=1 // loop_pre_header
      _
    $region3: #{tpu_custom_call.1} parent=1 // loop_header
      %s15 = sphi 0, %s19
      %p16 = scmp.ge.s32.totalorder %s15, 4
      %s25 = sphi 0, %s27
      %s28 = sphi 0, %s25
      %s29 = sphi 0, %s28
      %s45 = sphi 0, %s29
      %s51 = sphi 0, %s53
      %s54 = sphi 0, %s51
      %s55 = sphi 0, %s54
      %s71 = sphi 0, %s55
      %s77 = sphi 0, %s79
      %s80 = sphi 0, %s77
      %s81 = sphi 0, %s80
      %s97 = sphi 0, %s81
      %s101 = sphi 0, %s101
      %s103 = sphi 0, %s101
      %s104 = sphi 0, %s103
      %s118 = sphi 0, %s104
      %s122 = sphi 0, %s122
      %s124 = sphi 0, %s122
      %s125 = sphi 0, %s124
      %s139 = sphi 0, %s125
      %s145 = sphi 0, %s147
      %s148 = sphi 0, %s145
      %s149 = sphi 0, %s148
      %s165 = sphi 0, %s149
    $region4: #{tpu_custom_call.1} parent=1 // loop_header_branch
      %18 = sbr.rel (%p16) target = $region8
    $region5: #{tpu_custom_call.1} parent=1 // loop_body
      %s20 = ssub.s32 %s15, 1
      %s21 = ssub.s32 %s15, 2
      %s22 = sadd.s32 %s15, 1
      %s23 = ssub.s32 %s15, %s22
      %p24 = scmp.eq.s32.totalorder %s23, 0
      %s26 = sadd.s32 %s25, 1
      %s27 = scalar_select %p24, %s25, %s26
      %p30 = pneg %p24
      %p31 = scmp.eq.s32.totalorder %s15, 1
      %p32 = por %p30, %p31
      %p33 = scmp.ne.s32.totalorder %s25, %s28
      %p34 = scmp.eq.s32.totalorder %s15, 0
      %p35 = por %p33, %p34
      %p36 = scmp.ne.s32.totalorder %s25, %s28
      %p37 = scmp.eq.s32.totalorder %s20, 1
      %p38 = por %p36, %p37
      %p39 = scmp.ne.s32.totalorder %s28, %s29
      %p40 = scmp.eq.s32.totalorder %s20, 0
      %p41 = por %p39, %p40
      %p42 = scmp.ne.s32.totalorder %s28, %s29
      %p43 = scmp.eq.s32.totalorder %s21, 1
      %p44 = por %p42, %p43
      %p46 = scmp.ne.s32.totalorder %s29, %s45
      %p47 = scmp.eq.s32.totalorder %s21, 0
      %p48 = por %p46, %p47
      %s49 = ssub.s32 %s15, %s22
      %p50 = scmp.eq.s32.totalorder %s49, 0
      %s52 = sadd.s32 %s51, 1
      %s53 = scalar_select %p50, %s51, %s52
      %p56 = pneg %p50
      %p57 = scmp.eq.s32.totalorder %s15, 1
      %p58 = por %p56, %p57
      %p59 = scmp.ne.s32.totalorder %s51, %s54
      %p60 = scmp.eq.s32.totalorder %s15, 0
      %p61 = por %p59, %p60
      %p62 = scmp.ne.s32.totalorder %s51, %s54
      %p63 = scmp.eq.s32.totalorder %s20, 1
      %p64 = por %p62, %p63
      %p65 = scmp.ne.s32.totalorder %s54, %s55
      %p66 = scmp.eq.s32.totalorder %s20, 0
      %p67 = por %p65, %p66
      %p68 = scmp.ne.s32.totalorder %s54, %s55
      %p69 = scmp.eq.s32.totalorder %s21, 1
      %p70 = por %p68, %p69
      %p72 = scmp.ne.s32.totalorder %s55, %s71
      %p73 = scmp.eq.s32.totalorder %s21, 0
      %p74 = por %p72, %p73
      %s75 = ssub.s32 %s15, %s22
      %p76 = scmp.eq.s32.totalorder %s75, 0
      %s78 = sadd.s32 %s77, 1
      %s79 = scalar_select %p76, %s77, %s78
      %p82 = pneg %p76
      %p83 = scmp.eq.s32.totalorder %s15, 1
      %p84 = por %p82, %p83
      %p85 = scmp.ne.s32.totalorder %s77, %s80
      %p86 = scmp.eq.s32.totalorder %s15, 0
      %p87 = por %p85, %p86
      %p88 = scmp.ne.s32.totalorder %s77, %s80
      %p89 = scmp.eq.s32.totalorder %s20, 1
      %p90 = por %p88, %p89
      %p91 = scmp.ne.s32.totalorder %s80, %s81
      %p92 = scmp.eq.s32.totalorder %s20, 0
      %p93 = por %p91, %p92
      %p94 = scmp.ne.s32.totalorder %s80, %s81
      %p95 = scmp.eq.s32.totalorder %s21, 1
      %p96 = por %p94, %p95
      %p98 = scmp.ne.s32.totalorder %s81, %s97
      %p99 = scmp.eq.s32.totalorder %s21, 0
      %p100 = por %p98, %p99
      %s102 = sadd.s32 %s101, 1
      %p105 = scmp.eq.s32.totalorder %s15, 1
      %p106 = scmp.ne.s32.totalorder %s101, %s103
      %p107 = scmp.eq.s32.totalorder %s15, 0
      %p108 = por %p106, %p107
      %p109 = scmp.ne.s32.totalorder %s101, %s103
      %p110 = scmp.eq.s32.totalorder %s20, 1
      %p111 = por %p109, %p110
      %p112 = scmp.ne.s32.totalorder %s103, %s104
      %p113 = scmp.eq.s32.totalorder %s20, 0
      %p114 = por %p112, %p113
      %p115 = scmp.ne.s32.totalorder %s103, %s104
      %p116 = scmp.eq.s32.totalorder %s21, 1
      %p117 = por %p115, %p116
      %p119 = scmp.ne.s32.totalorder %s104, %s118
      %p120 = scmp.eq.s32.totalorder %s21, 0
      %p121 = por %p119, %p120
      %s123 = sadd.s32 %s122, 1
      %p126 = scmp.eq.s32.totalorder %s15, 1
      %p127 = scmp.ne.s32.totalorder %s122, %s124
      %p128 = scmp.eq.s32.totalorder %s15, 0
      %p129 = por %p127, %p128
      %p130 = scmp.ne.s32.totalorder %s122, %s124
      %p131 = scmp.eq.s32.totalorder %s20, 1
      %p132 = por %p130, %p131
      %p133 = scmp.ne.s32.totalorder %s124, %s125
      %p134 = scmp.eq.s32.totalorder %s20, 0
      %p135 = por %p133, %p134
      %p136 = scmp.ne.s32.totalorder %s124, %s125
      %p137 = scmp.eq.s32.totalorder %s21, 1
      %p138 = por %p136, %p137
      %p140 = scmp.ne.s32.totalorder %s125, %s139
      %p141 = scmp.eq.s32.totalorder %s21, 0
      %p142 = por %p140, %p141
      %s143 = ssub.s32 %s15, %s22
      %p144 = scmp.eq.s32.totalorder %s143, 0
      %s146 = sadd.s32 %s145, 1
      %s147 = scalar_select %p144, %s145, %s146
      %p150 = pneg %p144
      %p151 = scmp.eq.s32.totalorder %s15, 1
      %p152 = por %p150, %p151
      %p153 = scmp.ne.s32.totalorder %s145, %s148
      %p154 = scmp.eq.s32.totalorder %s15, 0
      %p155 = por %p153, %p154
      %p156 = scmp.ne.s32.totalorder %s145, %s148
      %p157 = scmp.eq.s32.totalorder %s20, 1
      %p158 = por %p156, %p157
      %p159 = scmp.ne.s32.totalorder %s148, %s149
      %p160 = scmp.eq.s32.totalorder %s20, 0
      %p161 = por %p159, %p160
      %p162 = scmp.ne.s32.totalorder %s148, %s149
      %p163 = scmp.eq.s32.totalorder %s21, 1
      %p164 = por %p162, %p163
      %p166 = scmp.ne.s32.totalorder %s149, %s165
      %p167 = scmp.eq.s32.totalorder %s21, 0
      %p168 = por %p166, %p167
      %p169 = scmp.le.s32.totalorder 1, %s15
      %p170 = scmp.lt.s32.totalorder %s15, 3
      %p171 = pnand %p169, %p170
      %p172 = pneg %p171
      // Predicated region
      $region9: #{tpu_custom_call.1} parent=5 // pred_check
        _
      $region10: #{tpu_custom_call.1} parent=5 // pred_check_branch
        %174 = sbr.rel (%p171) target = $region12
      $region11: #{tpu_custom_call.1} parent=5 // pred_region
        %s175 = ssub.s32 %s15, 1
        // Predicated region
        $region13: #{tpu_custom_call.1} parent=11 // pred_check
          %p176 = pneg %p114
        $region14: #{tpu_custom_call.1} parent=11 // pred_check_branch
          %178 = sbr.rel (%p176) target = $region16
        $region15: #{tpu_custom_call.1} parent=11 // pred_region
          %s180 = ssub.s32 4352, 4352
          %181 = vsyncadd [#allocation3], %s180
          %s182 = sshll.u32 [#allocation2], 4
          %s183 = int_to_ptr.vmem [resolvable:$true] %s182
          %188 = dma.hbm_to_vmem [thread:$0]  %s3, 4352, %s183, [#allocation3], 64, 64, 4
        $region16: #{tpu_custom_call.1} parent=11 // pred_fallthru
          _
        // Predicated region
        $region17: #{tpu_custom_call.1} parent=11 // pred_check
          %p189 = pneg %p135
        $region18: #{tpu_custom_call.1} parent=11 // pred_check_branch
          %191 = sbr.rel (%p189) target = $region20
        $region19: #{tpu_custom_call.1} parent=11 // pred_region
          _
        $region20: #{tpu_custom_call.1} parent=11 // pred_fallthru
          _
      $region12: #{tpu_custom_call.1} parent=5 // pred_fallthru
        _
      %p192 = scmp.lt.s32.totalorder %s15, 2
      // Predicated region
      $region21: #{tpu_custom_call.1} parent=5 // pred_check
        %p193 = pneg %p192
      $region22: #{tpu_custom_call.1} parent=5 // pred_check_branch
        %195 = sbr.rel (%p193) target = $region24
      $region23: #{tpu_custom_call.1} parent=5 // pred_region
        // Predicated region
        $region25: #{tpu_custom_call.1} parent=23 // pred_check
          %p196 = pneg %p35
        $region26: #{tpu_custom_call.1} parent=23 // pred_check_branch
          %198 = sbr.rel (%p196) target = $region28
        $region27: #{tpu_custom_call.1} parent=23 // pred_region
          %p199 = scmp.lt.s32.totalorder %s15, 1
          %s200 = scalar_select %p199, %s15, 1
          %s201 = smul.addr %s200, 8
          %s202 = scalar_lea.vmem %s0, %s201
        $region28: #{tpu_custom_call.1} parent=23 // pred_fallthru
          _
        // Predicated region
        $region29: #{tpu_custom_call.1} parent=23 // pred_check
          %p203 = pneg %p61
        $region30: #{tpu_custom_call.1} parent=23 // pred_check_branch
          %205 = sbr.rel (%p203) target = $region32
        $region31: #{tpu_custom_call.1} parent=23 // pred_region
          %p206 = scmp.lt.s32.totalorder %s15, 1
          %s207 = scalar_select %p206, %s15, 1
          %s208 = smul.addr %s207, 8
          %s209 = scalar_lea.vmem %s1, %s208
        $region32: #{tpu_custom_call.1} parent=23 // pred_fallthru
          _
        // Predicated region
        $region33: #{tpu_custom_call.1} parent=23 // pred_check
          %p210 = pneg %p87
        $region34: #{tpu_custom_call.1} parent=23 // pred_check_branch
          %212 = sbr.rel (%p210) target = $region36
        $region35: #{tpu_custom_call.1} parent=23 // pred_region
          %p213 = scmp.lt.s32.totalorder %s15, 1
          %s214 = scalar_select %p213, %s15, 1
          %s215 = smul.addr %s214, 8
          %s216 = scalar_lea.vmem %s2, %s215
        $region36: #{tpu_custom_call.1} parent=23 // pred_fallthru
          _
      $region24: #{tpu_custom_call.1} parent=5 // pred_fallthru
        _
      %p217 = scmp.le.s32.totalorder 1, %s15
      %p218 = scmp.lt.s32.totalorder %s15, 3
      %p219 = pnand %p217, %p218
      %p220 = pneg %p219
      // Predicated region
      $region37: #{tpu_custom_call.1} parent=5 // pred_check
        _
      $region38: #{tpu_custom_call.1} parent=5 // pred_check_branch
        %222 = sbr.rel (%p219) target = $region40
      $region39: #{tpu_custom_call.1} parent=5 // pred_region
        %s223 = ssub.s32 %s15, 1
        // Predicated region
        $region41: #{tpu_custom_call.1} parent=39 // pred_check
          %p224 = pneg %p114
        $region42: #{tpu_custom_call.1} parent=39 // pred_check_branch
          %226 = sbr.rel (%p224) target = $region44
        $region43: #{tpu_custom_call.1} parent=39 // pred_region
          %227 = dma.done [#allocation3], 4352
        $region44: #{tpu_custom_call.1} parent=39 // pred_fallthru
          _
        %p228 = scmp.lt.s32.totalorder %s20, 1
        %s229 = scalar_select %p228, %s20, 1
        %s230 = smul.addr %s229, 8
        %s231 = scalar_lea.vmem %s0, %s230
        %p232 = pneg %p41
        %p233 = pneg %p38
        %p234 = scmp.lt.s32.totalorder %s20, 1
        %s235 = scalar_select %p234, %s20, 1
        %s236 = smul.addr %s235, 8
        %s237 = scalar_lea.vmem %s1, %s236
        %p238 = pneg %p67
        %p239 = pneg %p64
        %p240 = scmp.lt.s32.totalorder %s20, 1
        %s241 = scalar_select %p240, %s20, 1
        %s242 = smul.addr %s241, 8
        %s243 = scalar_lea.vmem %s2, %s242
        %p244 = pneg %p93
        %p245 = pneg %p90
        %p246 = pneg %p114
        %p247 = pneg %p111
        %p248 = pneg %p135
        %p249 = pneg %p132
        %p250 = pneg %p161
        %p251 = pneg %p158
        %s252 = sand.u32 %s148, 1
        %s253 = scalar_lea.sflag [#allocation4], %s252
        %s254 = sand.u32 %s148, 1
        %s255 = smul.addr %s254, 8
        %s256 = scalar_lea.vmem [#allocation5], %s255
        %p257 = scmp.lt.s32.totalorder %s20, 1
        %s258 = scalar_select %p257, %s20, 1
        %s259 = smul.addr %s258, 8
        %s260 = scalar_lea.vmem %s0, %s259
        %p261 = scmp.lt.s32.totalorder %s20, 1
        %s262 = scalar_select %p261, %s20, 1
        %s263 = smul.addr %s262, 8
        %s264 = scalar_lea.vmem %s1, %s263
        %p265 = scmp.lt.s32.totalorder %s20, 1
        %s266 = scalar_select %p265, %s20, 1
        %s267 = smul.addr %s266, 8
        %s268 = scalar_lea.vmem %s2, %s267
        %v270 = vld [vmem:[%s260] sm:$0xff]
        %v271 = vld [vmem:[%s264] sm:$0xff]
        %v272 = vld [vmem:[%s268] sm:$0xff]
        %v273 = vld [vmem:[#allocation2] sm:$0x1]
        %v274 = vpack.c.bf16 %v270, %v270
        %v275 = vld [vmem:[%s4] sm:$0x1]
        %v277 = vlaneseq
        %v278 = vshrl.u32 %v277, 7
        %v279 = vsub.s32 0, %v278
        %v280 = vrot.slane %v275, %v279
        %vm282 = vcmask 15360
        %v284 = vsel %vm282, %v274, 0
        %vm286 = vcmask 1040384
        %v288 = vsel %vm286, %v273, 0
        %290 = vmatprep.subr.bf16.mxu0 0
        %291 = vmatpush1.bf16.msra.mxu0 %v288
        %292 = vmatprep.subr.bf16.mxu0 0
        %293 = vmatpush1.bf16.msra.mxu0 0
        %294 = vmatprep.subr.bf16.mxu0 0
        %295 = vmatpush1.bf16.msra.mxu0 0
        %296 = vmatprep.subr.bf16.mxu0 0
        %297 = vmatpush1.bf16.msra.mxu0 0
        %298 = vmatprep.subr.bf16.mxu0 0
        %299 = vmatpush1.bf16.msra.mxu0 0
        %300 = vmatprep.subr.bf16.mxu0 0
        %301 = vmatpush1.bf16.msra.mxu0 0
        %302 = vmatprep.subr.bf16.mxu0 0
        %303 = vmatpush1.bf16.msra.mxu0 0
        %304 = vmatprep.subr.bf16.mxu0 0
        %305 = vmatpush1.bf16.msra.mxu0 0
        %306 = vmatprep.subr.bf16.mxu0 0
        %307 = vmatpush1.bf16.msra.mxu0 0
        %308 = vmatprep.subr.bf16.mxu0 0
        %309 = vmatpush1.bf16.msra.mxu0 0
        %310 = vmatprep.subr.bf16.mxu0 0
        %311 = vmatpush1.bf16.msra.mxu0 0
        %312 = vmatprep.subr.bf16.mxu0 0
        %313 = vmatpush1.bf16.msra.mxu0 0
        %314 = vmatprep.subr.bf16.mxu0 0
        %315 = vmatpush1.bf16.msra.mxu0 0
        %316 = vmatprep.subr.bf16.mxu0 0
        %317 = vmatpush1.bf16.msra.mxu0 0
        %318 = vmatprep.subr.bf16.mxu0 0
        %319 = vmatpush1.bf16.msra.mxu0 0
        %320 = vmatprep.subr.bf16.mxu0 0
        %321 = vmatpush1.bf16.msra.mxu0 0
        %322 = vmatprep.mubr.bf16.mxu0 0
        %323 = vmatmul.mubr.bf16.gmra.mrb[0].mxu0 %v284
        %v324 = vpop.f32.mrb[0].mxu0
        %v325 = vadd.f32 %v280, %v324
        %v326 = vpop.f32.mrb[0].mxu0
        %v327 = vpop.f32.mrb[0].mxu0
        %v328 = vpop.f32.mrb[0].mxu0
        %329 = vdwg.mxu0
        %s330 = scalar_lea.vmem [#allocation2], 16
        %v331 = vld [vmem:[%s330] sm:$0x1]
        %v332 = vunpack.c.l.bf16 %v331
        %334 = vset.pattern.permute.xlu0 0
        %335 = vperm.xlu0 %334, %v271
        %v336 = vpop.permute.xlu0 %335
        %v338 = vlaneseq
        %v339 = vshrl.u32 %v338, 7
        %v340 = vsub.s32 0, %v339
        %v341 = vrot.slane %v332, %v340
        %v342 = vmul.f32 %v336, %v341
        %v343 = vadd.f32 %v325, %v342
        %s344 = scalar_lea.vmem [#allocation2], 32
        %v345 = vld [vmem:[%s344] sm:$0xf]
        %v346 = vld [vmem:[%s344 + $0x4] sm:$0xf]
        %v347 = vld [vmem:[%s344 + $0x8] sm:$0xf]
        %v348 = vld [vmem:[%s344 + $0xc] sm:$0xf]
        %v349 = vpack.c.bf16 %v343, %v343
        %s350 = scalar_lea.vmem %s4, 1
        %v351 = vld [vmem:[%s350] sm:$0x1]
        %v353 = vlaneseq
        %v354 = vshrl.u32 %v353, 7
        %v355 = vsub.s32 0, %v354
        %v356 = vrot.slane %v351, %v355
        %v362 = vunpack.c.l.b16 %v345
        %v363 = vunpack.c.l.b16 %v346
        %v364 = vunpack.c.l.b16 %v347
        %v365 = vunpack.c.l.b16 %v348
        %v366 = vpack.c.b16 %v363, %v362
        %v367 = vpack.c.b16 %v365, %v364
        %vm370 = vcmask 261120
        %v372 = vsel %vm370, %v349, 0
        %374 = vmatprep.subr.bf16.mxu0 0
        %375 = vmatpush1.bf16.msra.mxu0 %v366
        %376 = vmatprep.subr.bf16.mxu0 0
        %377 = vmatpush1.bf16.msra.mxu0 %v367
        %378 = vmatprep.subr.bf16.mxu0 0
        %379 = vmatpush1.bf16.msra.mxu0 0
        %380 = vmatprep.subr.bf16.mxu0 0
        %381 = vmatpush1.bf16.msra.mxu0 0
        %382 = vmatprep.subr.bf16.mxu0 0
        %383 = vmatpush1.bf16.msra.mxu0 0
        %384 = vmatprep.subr.bf16.mxu0 0
        %385 = vmatpush1.bf16.msra.mxu0 0
        %386 = vmatprep.subr.bf16.mxu0 0
        %387 = vmatpush1.bf16.msra.mxu0 0
        %388 = vmatprep.subr.bf16.mxu0 0
        %389 = vmatpush1.bf16.msra.mxu0 0
        %390 = vmatprep.subr.bf16.mxu0 0
        %391 = vmatpush1.bf16.msra.mxu0 0
        %392 = vmatprep.subr.bf16.mxu0 0
        %393 = vmatpush1.bf16.msra.mxu0 0
        %394 = vmatprep.subr.bf16.mxu0 0
        %395 = vmatpush1.bf16.msra.mxu0 0
        %396 = vmatprep.subr.bf16.mxu0 0
        %397 = vmatpush1.bf16.msra.mxu0 0
        %398 = vmatprep.subr.bf16.mxu0 0
        %399 = vmatpush1.bf16.msra.mxu0 0
        %400 = vmatprep.subr.bf16.mxu0 0
        %401 = vmatpush1.bf16.msra.mxu0 0
        %402 = vmatprep.subr.bf16.mxu0 0
        %403 = vmatpush1.bf16.msra.mxu0 0
        %404 = vmatprep.subr.bf16.mxu0 0
        %405 = vmatpush1.bf16.msra.mxu0 0
        %406 = vmatprep.mubr.bf16.mxu0 0
        %407 = vmatmul.mubr.bf16.gmra.mrb[0].mxu0 %v372
        %v408 = vpop.f32.mrb[0].mxu0
        %v409 = vadd.f32 %v356, %v408
        %v410 = vpop.f32.mrb[0].mxu0
        %v411 = vpop.f32.mrb[0].mxu0
        %v412 = vpop.f32.mrb[0].mxu0
        %413 = vdwg.mxu0
        %v414 = vmax.f32 %v409, 0.0
        %s415 = scalar_lea.vmem [#allocation2], 48
        %v416 = vld [vmem:[%s415] sm:$0xf]
        %v417 = vld [vmem:[%s415 + $0x4] sm:$0xf]
        %v418 = vld [vmem:[%s415 + $0x8] sm:$0xf]
        %v419 = vld [vmem:[%s415 + $0xc] sm:$0xf]
        %v420 = vpack.c.bf16 %v414, %v414
        %s421 = scalar_lea.vmem %s4, 2
        %v422 = vld [vmem:[%s421] sm:$0x1]
        %v424 = vlaneseq
        %v425 = vshrl.u32 %v424, 7
        %v426 = vsub.s32 0, %v425
        %v427 = vrot.slane %v422, %v426
        %v433 = vunpack.c.l.b16 %v416
        %v434 = vunpack.c.l.b16 %v417
        %v435 = vunpack.c.l.b16 %v418
        %v436 = vunpack.c.l.b16 %v419
        %v437 = vpack.c.b16 %v434, %v433
        %v438 = vpack.c.b16 %v436, %v435
        %v442 = vsel %vm370, %v420, 0
        %444 = vmatprep.subr.bf16.mxu0 0
        %445 = vmatpush1.bf16.msra.mxu0 %v437
        %446 = vmatprep.subr.bf16.mxu0 0
        %447 = vmatpush1.bf16.msra.mxu0 %v438
        %448 = vmatprep.subr.bf16.mxu0 0
        %449 = vmatpush1.bf16.msra.mxu0 0
        %450 = vmatprep.subr.bf16.mxu0 0
        %451 = vmatpush1.bf16.msra.mxu0 0
        %452 = vmatprep.subr.bf16.mxu0 0
        %453 = vmatpush1.bf16.msra.mxu0 0
        %454 = vmatprep.subr.bf16.mxu0 0
        %455 = vmatpush1.bf16.msra.mxu0 0
        %456 = vmatprep.subr.bf16.mxu0 0
        %457 = vmatpush1.bf16.msra.mxu0 0
        %458 = vmatprep.subr.bf16.mxu0 0
        %459 = vmatpush1.bf16.msra.mxu0 0
        %460 = vmatprep.subr.bf16.mxu0 0
        %461 = vmatpush1.bf16.msra.mxu0 0
        %462 = vmatprep.subr.bf16.mxu0 0
        %463 = vmatpush1.bf16.msra.mxu0 0
        %464 = vmatprep.subr.bf16.mxu0 0
        %465 = vmatpush1.bf16.msra.mxu0 0
        %466 = vmatprep.subr.bf16.mxu0 0
        %467 = vmatpush1.bf16.msra.mxu0 0
        %468 = vmatprep.subr.bf16.mxu0 0
        %469 = vmatpush1.bf16.msra.mxu0 0
        %470 = vmatprep.subr.bf16.mxu0 0
        %471 = vmatpush1.bf16.msra.mxu0 0
        %472 = vmatprep.subr.bf16.mxu0 0
        %473 = vmatpush1.bf16.msra.mxu0 0
        %474 = vmatprep.subr.bf16.mxu0 0
        %475 = vmatpush1.bf16.msra.mxu0 0
        %476 = vmatprep.mubr.bf16.mxu0 0
        %477 = vmatmul.mubr.bf16.gmra.mrb[0].mxu0 %v442
        %v478 = vpop.f32.mrb[0].mxu0
        %v479 = vadd.f32 %v427, %v478
        %v480 = vpop.f32.mrb[0].mxu0
        %v481 = vpop.f32.mrb[0].mxu0
        %v482 = vpop.f32.mrb[0].mxu0
        %483 = vdwg.mxu0
        %s484 = scalar_lea.vmem [#allocation2], 64
        %v485 = vld [vmem:[%s484] sm:$0xf]
        %v486 = vld [vmem:[%s484 + $0x4] sm:$0xf]
        %v487 = vld [vmem:[%s484 + $0x8] sm:$0xf]
        %v488 = vld [vmem:[%s484 + $0xc] sm:$0xf]
        %v489 = vpack.c.bf16 %v479, %v479
        %s490 = scalar_lea.vmem %s4, 3
        %v491 = vld [vmem:[%s490] sm:$0x1]
        %v493 = vlaneseq
        %v494 = vshrl.u32 %v493, 7
        %v495 = vsub.s32 0, %v494
        %v496 = vrot.slane %v491, %v495
        %v502 = vunpack.c.l.b16 %v485
        %v503 = vunpack.c.l.b16 %v486
        %v504 = vunpack.c.l.b16 %v487
        %v505 = vunpack.c.l.b16 %v488
        %v506 = vpack.c.b16 %v503, %v502
        %v507 = vpack.c.b16 %v505, %v504
        %v511 = vsel %vm370, %v489, 0
        %513 = vmatprep.subr.bf16.mxu0 0
        %514 = vmatpush1.bf16.msra.mxu0 %v506
        %515 = vmatprep.subr.bf16.mxu0 0
        %516 = vmatpush1.bf16.msra.mxu0 %v507
        %517 = vmatprep.subr.bf16.mxu0 0
        %518 = vmatpush1.bf16.msra.mxu0 0
        %519 = vmatprep.subr.bf16.mxu0 0
        %520 = vmatpush1.bf16.msra.mxu0 0
        %521 = vmatprep.subr.bf16.mxu0 0
        %522 = vmatpush1.bf16.msra.mxu0 0
        %523 = vmatprep.subr.bf16.mxu0 0
        %524 = vmatpush1.bf16.msra.mxu0 0
        %525 = vmatprep.subr.bf16.mxu0 0
        %526 = vmatpush1.bf16.msra.mxu0 0
        %527 = vmatprep.subr.bf16.mxu0 0
        %528 = vmatpush1.bf16.msra.mxu0 0
        %529 = vmatprep.subr.bf16.mxu0 0
        %530 = vmatpush1.bf16.msra.mxu0 0
        %531 = vmatprep.subr.bf16.mxu0 0
        %532 = vmatpush1.bf16.msra.mxu0 0
        %533 = vmatprep.subr.bf16.mxu0 0
        %534 = vmatpush1.bf16.msra.mxu0 0
        %535 = vmatprep.subr.bf16.mxu0 0
        %536 = vmatpush1.bf16.msra.mxu0 0
        %537 = vmatprep.subr.bf16.mxu0 0
        %538 = vmatpush1.bf16.msra.mxu0 0
        %539 = vmatprep.subr.bf16.mxu0 0
        %540 = vmatpush1.bf16.msra.mxu0 0
        %541 = vmatprep.subr.bf16.mxu0 0
        %542 = vmatpush1.bf16.msra.mxu0 0
        %543 = vmatprep.subr.bf16.mxu0 0
        %544 = vmatpush1.bf16.msra.mxu0 0
        %545 = vmatprep.mubr.bf16.mxu0 0
        %546 = vmatmul.mubr.bf16.gmra.mrb[0].mxu0 %v511
        %v547 = vpop.f32.mrb[0].mxu0
        %v548 = vadd.f32 %v496, %v547
        %v549 = vpop.f32.mrb[0].mxu0
        %v550 = vpop.f32.mrb[0].mxu0
        %v551 = vpop.f32.mrb[0].mxu0
        %552 = vdwg.mxu0
        %s553 = scalar_lea.vmem [#allocation2], 80
        %v554 = vld [vmem:[%s553] sm:$0xf]
        %v555 = vld [vmem:[%s553 + $0x4] sm:$0xf]
        %v556 = vld [vmem:[%s553 + $0x8] sm:$0xf]
        %v557 = vld [vmem:[%s553 + $0xc] sm:$0xf]
        %s558 = scalar_lea.vmem %s4, 4
        %v559 = vld [vmem:[%s558] sm:$0x1]
        %v561 = vlaneseq
        %v562 = vshrl.u32 %v561, 7
        %v563 = vsub.s32 0, %v562
        %v564 = vrot.slane %v559, %v563
        %v570 = vunpack.c.l.b16 %v554
        %v571 = vunpack.c.l.b16 %v555
        %v572 = vunpack.c.l.b16 %v556
        %v573 = vunpack.c.l.b16 %v557
        %v574 = vpack.c.b16 %v571, %v570
        %v575 = vpack.c.b16 %v573, %v572
        %578 = vmatprep.subr.bf16.mxu0 0
        %579 = vmatpush1.bf16.msra.mxu0 %v574
        %580 = vmatprep.subr.bf16.mxu0 0
        %581 = vmatpush1.bf16.msra.mxu0 %v575
        %582 = vmatprep.subr.bf16.mxu0 0
        %583 = vmatpush1.bf16.msra.mxu0 0
        %584 = vmatprep.subr.bf16.mxu0 0
        %585 = vmatpush1.bf16.msra.mxu0 0
        %586 = vmatprep.subr.bf16.mxu0 0
        %587 = vmatpush1.bf16.msra.mxu0 0
        %588 = vmatprep.subr.bf16.mxu0 0
        %589 = vmatpush1.bf16.msra.mxu0 0
        %590 = vmatprep.subr.bf16.mxu0 0
        %591 = vmatpush1.bf16.msra.mxu0 0
        %592 = vmatprep.subr.bf16.mxu0 0
        %593 = vmatpush1.bf16.msra.mxu0 0
        %594 = vmatprep.subr.bf16.mxu0 0
        %595 = vmatpush1.bf16.msra.mxu0 0
        %596 = vmatprep.subr.bf16.mxu0 0
        %597 = vmatpush1.bf16.msra.mxu0 0
        %598 = vmatprep.subr.bf16.mxu0 0
        %599 = vmatpush1.bf16.msra.mxu0 0
        %600 = vmatprep.subr.bf16.mxu0 0
        %601 = vmatpush1.bf16.msra.mxu0 0
        %602 = vmatprep.subr.bf16.mxu0 0
        %603 = vmatpush1.bf16.msra.mxu0 0
        %604 = vmatprep.subr.bf16.mxu0 0
        %605 = vmatpush1.bf16.msra.mxu0 0
        %606 = vmatprep.subr.bf16.mxu0 0
        %607 = vmatpush1.bf16.msra.mxu0 0
        %608 = vmatprep.subr.bf16.mxu0 0
        %609 = vmatpush1.bf16.msra.mxu0 0
        %610 = vmatprep.mubr.bf16.mxu0 0
        %611 = vmatmul.mubr.bf16.gmra.mrb[0].mxu0 %v511
        %v612 = vpop.f32.mrb[0].mxu0
        %v613 = vadd.f32 %v564, %v612
        %v614 = vpop.f32.mrb[0].mxu0
        %v615 = vpop.f32.mrb[0].mxu0
        %v616 = vpop.f32.mrb[0].mxu0
        %617 = vdwg.mxu0
        %s618 = scalar_lea.vmem [#allocation2], 96
        %v619 = vld [vmem:[%s618] sm:$0xf]
        %v620 = vld [vmem:[%s618 + $0x4] sm:$0xf]
        %v621 = vld [vmem:[%s618 + $0x8] sm:$0xf]
        %v622 = vld [vmem:[%s618 + $0xc] sm:$0xf]
        %s623 = scalar_lea.vmem %s4, 5
        %v624 = vld [vmem:[%s623] sm:$0x1]
        %v626 = vlaneseq
        %v627 = vshrl.u32 %v626, 7
        %v628 = vsub.s32 0, %v627
        %v629 = vrot.slane %v624, %v628
        %v635 = vunpack.c.l.b16 %v619
        %v636 = vunpack.c.l.b16 %v620
        %v637 = vunpack.c.l.b16 %v621
        %v638 = vunpack.c.l.b16 %v622
        %v639 = vpack.c.b16 %v636, %v635
        %v640 = vpack.c.b16 %v638, %v637
        %643 = vmatprep.subr.bf16.mxu0 0
        %644 = vmatpush1.bf16.msra.mxu0 %v639
        %645 = vmatprep.subr.bf16.mxu0 0
        %646 = vmatpush1.bf16.msra.mxu0 %v640
        %647 = vmatprep.subr.bf16.mxu0 0
        %648 = vmatpush1.bf16.msra.mxu0 0
        %649 = vmatprep.subr.bf16.mxu0 0
        %650 = vmatpush1.bf16.msra.mxu0 0
        %651 = vmatprep.subr.bf16.mxu0 0
        %652 = vmatpush1.bf16.msra.mxu0 0
        %653 = vmatprep.subr.bf16.mxu0 0
        %654 = vmatpush1.bf16.msra.mxu0 0
        %655 = vmatprep.subr.bf16.mxu0 0
        %656 = vmatpush1.bf16.msra.mxu0 0
        %657 = vmatprep.subr.bf16.mxu0 0
        %658 = vmatpush1.bf16.msra.mxu0 0
        %659 = vmatprep.subr.bf16.mxu0 0
        %660 = vmatpush1.bf16.msra.mxu0 0
        %661 = vmatprep.subr.bf16.mxu0 0
        %662 = vmatpush1.bf16.msra.mxu0 0
        %663 = vmatprep.subr.bf16.mxu0 0
        %664 = vmatpush1.bf16.msra.mxu0 0
        %665 = vmatprep.subr.bf16.mxu0 0
        %666 = vmatpush1.bf16.msra.mxu0 0
        %667 = vmatprep.subr.bf16.mxu0 0
        %668 = vmatpush1.bf16.msra.mxu0 0
        %669 = vmatprep.subr.bf16.mxu0 0
        %670 = vmatpush1.bf16.msra.mxu0 0
        %671 = vmatprep.subr.bf16.mxu0 0
        %672 = vmatpush1.bf16.msra.mxu0 0
        %673 = vmatprep.subr.bf16.mxu0 0
        %674 = vmatpush1.bf16.msra.mxu0 0
        %675 = vmatprep.mubr.bf16.mxu0 0
        %676 = vmatmul.mubr.bf16.gmra.mrb[0].mxu0 %v511
        %v677 = vpop.f32.mrb[0].mxu0
        %v678 = vadd.f32 %v629, %v677
        %v679 = vpop.f32.mrb[0].mxu0
        %v680 = vpop.f32.mrb[0].mxu0
        %v681 = vpop.f32.mrb[0].mxu0
        %682 = vdwg.mxu0
        %v683 = vmul.f32 %v548, 0.17677669
        %v684 = vpack.c.bf16 %v683, %v683
        %v685 = vpack.c.bf16 %v613, %v613
        %v687 = vsel %vm370, %v684, 0
        %v690 = vsel %vm370, %v685, 0
        %692 = vmatprep.subr.bf16.mxu0 0
        %693 = vmatpush1.bf16.xpose.msra.mxu0 %v690
        %694 = vmatprep.subr.bf16.mxu0 0
        %695 = vmatpush1.bf16.xpose.msra.mxu0 0
        %696 = vmatprep.subr.bf16.mxu0 0
        %697 = vmatpush1.bf16.xpose.msra.mxu0 0
        %698 = vmatprep.subr.bf16.mxu0 0
        %699 = vmatpush1.bf16.xpose.msra.mxu0 0
        %700 = vmatprep.subr.bf16.mxu0 0
        %701 = vmatpush1.bf16.xpose.msra.mxu0 0
        %702 = vmatprep.subr.bf16.mxu0 0
        %703 = vmatpush1.bf16.xpose.msra.mxu0 0
        %704 = vmatprep.subr.bf16.mxu0 0
        %705 = vmatpush1.bf16.xpose.msra.mxu0 0
        %706 = vmatprep.subr.bf16.mxu0 0
        %707 = vmatpush1.bf16.xpose.msra.mxu0 0
        %708 = vmatprep.subr.bf16.mxu0 0
        %709 = vmatpush1.bf16.xpose.msra.mxu0 0
        %710 = vmatprep.subr.bf16.mxu0 0
        %711 = vmatpush1.bf16.xpose.msra.mxu0 0
        %712 = vmatprep.subr.bf16.mxu0 0
        %713 = vmatpush1.bf16.xpose.msra.mxu0 0
        %714 = vmatprep.subr.bf16.mxu0 0
        %715 = vmatpush1.bf16.xpose.msra.mxu0 0
        %716 = vmatprep.subr.bf16.mxu0 0
        %717 = vmatpush1.bf16.xpose.msra.mxu0 0
        %718 = vmatprep.subr.bf16.mxu0 0
        %719 = vmatpush1.bf16.xpose.msra.mxu0 0
        %720 = vmatprep.subr.bf16.mxu0 0
        %721 = vmatpush1.bf16.xpose.msra.mxu0 0
        %722 = vmatprep.subr.bf16.mxu0 0
        %723 = vmatpush1.bf16.xpose.msra.mxu0 0
        %724 = vmatprep.mubr.bf16.mxu0 0
        %725 = vmatmul.mubr.bf16.gmra.mrb[0].mxu0 %v687
        %v726 = vpop.f32.mrb[0].mxu0
        %v727 = vadd.f32 0.0, %v726
        %v728 = vpop.f32.mrb[0].mxu0
        %v729 = vpop.f32.mrb[0].mxu0
        %v730 = vpop.f32.mrb[0].mxu0
        %731 = vdwg.mxu0
        %vm732 = vcmask 64512
        %v733 = vsel %vm732, %v727, -inf
        %734 = vmax.xlane.f32.xlu0 %v733
        %v735 = vpop.xlane.xlu0 %734
        %v736 = vsub.f32 %v727, %v735
        %v737 = vmul.f32 %v736, 1.442695
        %v738 = vpow.pop %v737
        %v739 = vsel %vm732, %v738, 0.0
        %740 = vadd.xlane.f32.xlu0 %v739
        %v741 = vpop.xlane.xlu0 %740
        %v742 = vrcp.pop %v741
        %v743 = vmul.f32 %v738, %v742
        %v744 = vpack.c.bf16 %v743, %v743
        %v745 = vpack.c.bf16 %v678, %v678
        %v747 = vsel %vm732, %v744, 0
        %vm749 = vcmask 1043456
        %v751 = vsel %vm749, %v745, 0
        %753 = vmatprep.subr.bf16.mxu0 0
        %754 = vmatpush1.bf16.msra.mxu0 %v751
        %755 = vmatprep.subr.bf16.mxu0 0
        %756 = vmatpush1.bf16.msra.mxu0 0
        %757 = vmatprep.subr.bf16.mxu0 0
        %758 = vmatpush1.bf16.msra.mxu0 0
        %759 = vmatprep.subr.bf16.mxu0 0
        %760 = vmatpush1.bf16.msra.mxu0 0
        %761 = vmatprep.subr.bf16.mxu0 0
        %762 = vmatpush1.bf16.msra.mxu0 0
        %763 = vmatprep.subr.bf16.mxu0 0
        %764 = vmatpush1.bf16.msra.mxu0 0
        %765 = vmatprep.subr.bf16.mxu0 0
        %766 = vmatpush1.bf16.msra.mxu0 0
        %767 = vmatprep.subr.bf16.mxu0 0
        %768 = vmatpush1.bf16.msra.mxu0 0
        %769 = vmatprep.subr.bf16.mxu0 0
        %770 = vmatpush1.bf16.msra.mxu0 0
        %771 = vmatprep.subr.bf16.mxu0 0
        %772 = vmatpush1.bf16.msra.mxu0 0
        %773 = vmatprep.subr.bf16.mxu0 0
        %774 = vmatpush1.bf16.msra.mxu0 0
        %775 = vmatprep.subr.bf16.mxu0 0
        %776 = vmatpush1.bf16.msra.mxu0 0
        %777 = vmatprep.subr.bf16.mxu0 0
        %778 = vmatpush1.bf16.msra.mxu0 0
        %779 = vmatprep.subr.bf16.mxu0 0
        %780 = vmatpush1.bf16.msra.mxu0 0
        %781 = vmatprep.subr.bf16.mxu0 0
        %782 = vmatpush1.bf16.msra.mxu0 0
        %783 = vmatprep.subr.bf16.mxu0 0
        %784 = vmatpush1.bf16.msra.mxu0 0
        %785 = vmatprep.mubr.bf16.mxu0 0
        %786 = vmatmul.mubr.bf16.gmra.mrb[0].mxu0 %v747
        %v787 = vpop.f32.mrb[0].mxu0
        %v788 = vadd.f32 0.0, %v787
        %v789 = vpop.f32.mrb[0].mxu0
        %v790 = vpop.f32.mrb[0].mxu0
        %v791 = vpop.f32.mrb[0].mxu0
        %792 = vdwg.mxu0
        %s793 = scalar_lea.vmem [#allocation2], 112
        %v794 = vld [vmem:[%s793] sm:$0xf]
        %v795 = vld [vmem:[%s793 + $0x4] sm:$0xf]
        %v796 = vld [vmem:[%s793 + $0x8] sm:$0xf]
        %v797 = vld [vmem:[%s793 + $0xc] sm:$0xf]
        %v798 = vpack.c.bf16 %v788, %v788
        %s799 = scalar_lea.vmem %s4, 6
        %v800 = vld [vmem:[%s799] sm:$0x1]
        %v802 = vlaneseq
        %v803 = vshrl.u32 %v802, 7
        %v804 = vsub.s32 0, %v803
        %v805 = vrot.slane %v800, %v804
        %v811 = vunpack.c.l.b16 %v794
        %v812 = vunpack.c.l.b16 %v795
        %v813 = vunpack.c.l.b16 %v796
        %v814 = vunpack.c.l.b16 %v797
        %v815 = vpack.c.b16 %v812, %v811
        %v816 = vpack.c.b16 %v814, %v813
        %v820 = vsel %vm370, %v798, 0
        %822 = vmatprep.subr.bf16.mxu0 0
        %823 = vmatpush1.bf16.msra.mxu0 %v815
        %824 = vmatprep.subr.bf16.mxu0 0
        %825 = vmatpush1.bf16.msra.mxu0 %v816
        %826 = vmatprep.subr.bf16.mxu0 0
        %827 = vmatpush1.bf16.msra.mxu0 0
        %828 = vmatprep.subr.bf16.mxu0 0
        %829 = vmatpush1.bf16.msra.mxu0 0
        %830 = vmatprep.subr.bf16.mxu0 0
        %831 = vmatpush1.bf16.msra.mxu0 0
        %832 = vmatprep.subr.bf16.mxu0 0
        %833 = vmatpush1.bf16.msra.mxu0 0
        %834 = vmatprep.subr.bf16.mxu0 0
        %835 = vmatpush1.bf16.msra.mxu0 0
        %836 = vmatprep.subr.bf16.mxu0 0
        %837 = vmatpush1.bf16.msra.mxu0 0
        %838 = vmatprep.subr.bf16.mxu0 0
        %839 = vmatpush1.bf16.msra.mxu0 0
        %840 = vmatprep.subr.bf16.mxu0 0
        %841 = vmatpush1.bf16.msra.mxu0 0
        %842 = vmatprep.subr.bf16.mxu0 0
        %843 = vmatpush1.bf16.msra.mxu0 0
        %844 = vmatprep.subr.bf16.mxu0 0
        %845 = vmatpush1.bf16.msra.mxu0 0
        %846 = vmatprep.subr.bf16.mxu0 0
        %847 = vmatpush1.bf16.msra.mxu0 0
        %848 = vmatprep.subr.bf16.mxu0 0
        %849 = vmatpush1.bf16.msra.mxu0 0
        %850 = vmatprep.subr.bf16.mxu0 0
        %851 = vmatpush1.bf16.msra.mxu0 0
        %852 = vmatprep.subr.bf16.mxu0 0
        %853 = vmatpush1.bf16.msra.mxu0 0
        %854 = vmatprep.mubr.bf16.mxu0 0
        %855 = vmatmul.mubr.bf16.gmra.mrb[0].mxu0 %v820
        %v856 = vpop.f32.mrb[0].mxu0
        %v857 = vadd.f32 %v805, %v856
        %v858 = vpop.f32.mrb[0].mxu0
        %v859 = vpop.f32.mrb[0].mxu0
        %v860 = vpop.f32.mrb[0].mxu0
        %861 = vdwg.mxu0
        %s862 = scalar_lea.vmem [#allocation2], 128
        %v863 = vld [vmem:[%s862] sm:$0xf]
        %v864 = vld [vmem:[%s862 + $0x4] sm:$0xf]
        %v865 = vld [vmem:[%s862 + $0x8] sm:$0xf]
        %v866 = vld [vmem:[%s862 + $0xc] sm:$0xf]
        %v867 = vpack.c.bf16 %v857, %v857
        %s868 = scalar_lea.vmem %s4, 7
        %v869 = vld [vmem:[%s868] sm:$0x1]
        %v871 = vlaneseq
        %v872 = vshrl.u32 %v871, 7
        %v873 = vsub.s32 0, %v872
        %v874 = vrot.slane %v869, %v873
        %v880 = vunpack.c.l.b16 %v863
        %v881 = vunpack.c.l.b16 %v864
        %v882 = vunpack.c.l.b16 %v865
        %v883 = vunpack.c.l.b16 %v866
        %v884 = vpack.c.b16 %v881, %v880
        %v885 = vpack.c.b16 %v883, %v882
        %v889 = vsel %vm370, %v867, 0
        %891 = vmatprep.subr.bf16.mxu0 0
        %892 = vmatpush1.bf16.msra.mxu0 %v884
        %893 = vmatprep.subr.bf16.mxu0 0
        %894 = vmatpush1.bf16.msra.mxu0 %v885
        %895 = vmatprep.subr.bf16.mxu0 0
        %896 = vmatpush1.bf16.msra.mxu0 0
        %897 = vmatprep.subr.bf16.mxu0 0
        %898 = vmatpush1.bf16.msra.mxu0 0
        %899 = vmatprep.subr.bf16.mxu0 0
        %900 = vmatpush1.bf16.msra.mxu0 0
        %901 = vmatprep.subr.bf16.mxu0 0
        %902 = vmatpush1.bf16.msra.mxu0 0
        %903 = vmatprep.subr.bf16.mxu0 0
        %904 = vmatpush1.bf16.msra.mxu0 0
        %905 = vmatprep.subr.bf16.mxu0 0
        %906 = vmatpush1.bf16.msra.mxu0 0
        %907 = vmatprep.subr.bf16.mxu0 0
        %908 = vmatpush1.bf16.msra.mxu0 0
        %909 = vmatprep.subr.bf16.mxu0 0
        %910 = vmatpush1.bf16.msra.mxu0 0
        %911 = vmatprep.subr.bf16.mxu0 0
        %912 = vmatpush1.bf16.msra.mxu0 0
        %913 = vmatprep.subr.bf16.mxu0 0
        %914 = vmatpush1.bf16.msra.mxu0 0
        %915 = vmatprep.subr.bf16.mxu0 0
        %916 = vmatpush1.bf16.msra.mxu0 0
        %917 = vmatprep.subr.bf16.mxu0 0
        %918 = vmatpush1.bf16.msra.mxu0 0
        %919 = vmatprep.subr.bf16.mxu0 0
        %920 = vmatpush1.bf16.msra.mxu0 0
        %921 = vmatprep.subr.bf16.mxu0 0
        %922 = vmatpush1.bf16.msra.mxu0 0
        %923 = vmatprep.mubr.bf16.mxu0 0
        %924 = vmatmul.mubr.bf16.gmra.mrb[0].mxu0 %v889
        %v925 = vpop.f32.mrb[0].mxu0
        %v926 = vadd.f32 %v874, %v925
        %v927 = vpop.f32.mrb[0].mxu0
        %v928 = vpop.f32.mrb[0].mxu0
        %v929 = vpop.f32.mrb[0].mxu0
        %930 = vdwg.mxu0
        %s931 = scalar_lea.vmem [#allocation2], 144
        %v932 = vld [vmem:[%s931] sm:$0x1]
        %v933 = vpack.c.bf16 %v272, %v272
        %s934 = scalar_lea.vmem %s4, 8
        %v935 = vld [vmem:[%s934] sm:$0x1]
        %v937 = vlaneseq
        %v938 = vshrl.u32 %v937, 7
        %v939 = vsub.s32 0, %v938
        %v940 = vrot.slane %v935, %v939
        %v943 = vsel %vm282, %v933, 0
        %v946 = vsel %vm286, %v932, 0
        %948 = vmatprep.subr.bf16.mxu0 0
        %949 = vmatpush1.bf16.msra.mxu0 %v946
        %950 = vmatprep.subr.bf16.mxu0 0
        %951 = vmatpush1.bf16.msra.mxu0 0
        %952 = vmatprep.subr.bf16.mxu0 0
        %953 = vmatpush1.bf16.msra.mxu0 0
        %954 = vmatprep.subr.bf16.mxu0 0
        %955 = vmatpush1.bf16.msra.mxu0 0
        %956 = vmatprep.subr.bf16.mxu0 0
        %957 = vmatpush1.bf16.msra.mxu0 0
        %958 = vmatprep.subr.bf16.mxu0 0
        %959 = vmatpush1.bf16.msra.mxu0 0
        %960 = vmatprep.subr.bf16.mxu0 0
        %961 = vmatpush1.bf16.msra.mxu0 0
        %962 = vmatprep.subr.bf16.mxu0 0
        %963 = vmatpush1.bf16.msra.mxu0 0
        %964 = vmatprep.subr.bf16.mxu0 0
        %965 = vmatpush1.bf16.msra.mxu0 0
        %966 = vmatprep.subr.bf16.mxu0 0
        %967 = vmatpush1.bf16.msra.mxu0 0
        %968 = vmatprep.subr.bf16.mxu0 0
        %969 = vmatpush1.bf16.msra.mxu0 0
        %970 = vmatprep.subr.bf16.mxu0 0
        %971 = vmatpush1.bf16.msra.mxu0 0
        %972 = vmatprep.subr.bf16.mxu0 0
        %973 = vmatpush1.bf16.msra.mxu0 0
        %974 = vmatprep.subr.bf16.mxu0 0
        %975 = vmatpush1.bf16.msra.mxu0 0
        %976 = vmatprep.subr.bf16.mxu0 0
        %977 = vmatpush1.bf16.msra.mxu0 0
        %978 = vmatprep.subr.bf16.mxu0 0
        %979 = vmatpush1.bf16.msra.mxu0 0
        %980 = vmatprep.mubr.bf16.mxu0 0
        %981 = vmatmul.mubr.bf16.gmra.mrb[0].mxu0 %v943
        %v982 = vpop.f32.mrb[0].mxu0
        %v983 = vadd.f32 %v940, %v982
        %v984 = vpop.f32.mrb[0].mxu0
        %v985 = vpop.f32.mrb[0].mxu0
        %v986 = vpop.f32.mrb[0].mxu0
        %987 = vdwg.mxu0
        %v988 = vxor.u32 %v983, 2147483648
        %v989 = vmul.f32 %v988, 1.442695
        %v990 = vpow.pop %v989
        %v991 = vadd.f32 %v990, 1.0
        %v992 = vrcp.pop %v991
        %v993 = vmul.f32 1.0, %v992
        %v994 = vmul.f32 %v983, %v993
        %s995 = scalar_lea.vmem [#allocation2], 160
        %v996 = vld [vmem:[%s995] sm:$0xf]
        %v997 = vld [vmem:[%s995 + $0x4] sm:$0xf]
        %v998 = vld [vmem:[%s995 + $0x8] sm:$0xf]
        %v999 = vld [vmem:[%s995 + $0xc] sm:$0xf]
        %v1000 = vpack.c.bf16 %v994, %v994
        %s1001 = scalar_lea.vmem %s4, 9
        %v1002 = vld [vmem:[%s1001] sm:$0x1]
        %v1004 = vlaneseq
        %v1005 = vshrl.u32 %v1004, 7
        %v1006 = vsub.s32 0, %v1005
        %v1007 = vrot.slane %v1002, %v1006
        %v1013 = vunpack.c.l.b16 %v996
        %v1014 = vunpack.c.l.b16 %v997
        %v1015 = vunpack.c.l.b16 %v998
        %v1016 = vunpack.c.l.b16 %v999
        %v1017 = vpack.c.b16 %v1014, %v1013
        %v1018 = vpack.c.b16 %v1016, %v1015
        %v1022 = vsel %vm370, %v1000, 0
        %1024 = vmatprep.subr.bf16.mxu0 0
        %1025 = vmatpush1.bf16.msra.mxu0 %v1017
        %1026 = vmatprep.subr.bf16.mxu0 0
        %1027 = vmatpush1.bf16.msra.mxu0 %v1018
        %1028 = vmatprep.subr.bf16.mxu0 0
        %1029 = vmatpush1.bf16.msra.mxu0 0
        %1030 = vmatprep.subr.bf16.mxu0 0
        %1031 = vmatpush1.bf16.msra.mxu0 0
        %1032 = vmatprep.subr.bf16.mxu0 0
        %1033 = vmatpush1.bf16.msra.mxu0 0
        %1034 = vmatprep.subr.bf16.mxu0 0
        %1035 = vmatpush1.bf16.msra.mxu0 0
        %1036 = vmatprep.subr.bf16.mxu0 0
        %1037 = vmatpush1.bf16.msra.mxu0 0
        %1038 = vmatprep.subr.bf16.mxu0 0
        %1039 = vmatpush1.bf16.msra.mxu0 0
        %1040 = vmatprep.subr.bf16.mxu0 0
        %1041 = vmatpush1.bf16.msra.mxu0 0
        %1042 = vmatprep.subr.bf16.mxu0 0
        %1043 = vmatpush1.bf16.msra.mxu0 0
        %1044 = vmatprep.subr.bf16.mxu0 0
        %1045 = vmatpush1.bf16.msra.mxu0 0
        %1046 = vmatprep.subr.bf16.mxu0 0
        %1047 = vmatpush1.bf16.msra.mxu0 0
        %1048 = vmatprep.subr.bf16.mxu0 0
        %1049 = vmatpush1.bf16.msra.mxu0 0
        %1050 = vmatprep.subr.bf16.mxu0 0
        %1051 = vmatpush1.bf16.msra.mxu0 0
        %1052 = vmatprep.subr.bf16.mxu0 0
        %1053 = vmatpush1.bf16.msra.mxu0 0
        %1054 = vmatprep.subr.bf16.mxu0 0
        %1055 = vmatpush1.bf16.msra.mxu0 0
        %1056 = vmatprep.mubr.bf16.mxu0 0
        %1057 = vmatmul.mubr.bf16.gmra.mrb[0].mxu0 %v1022
        %v1058 = vpop.f32.mrb[0].mxu0
        %v1059 = vadd.f32 %v1007, %v1058
        %v1060 = vpop.f32.mrb[0].mxu0
        %v1061 = vpop.f32.mrb[0].mxu0
        %v1062 = vpop.f32.mrb[0].mxu0
        %1063 = vdwg.mxu0
        %s1064 = scalar_lea.vmem [#allocation2], 176
        %v1065 = vld [vmem:[%s1064] sm:$0x1]
        %s1066 = scalar_lea.vmem %s4, 10
        %v1067 = vld [vmem:[%s1066] sm:$0x1]
        %v1069 = vlaneseq
        %v1070 = vshrl.u32 %v1069, 7
        %v1071 = vsub.s32 0, %v1070
        %v1072 = vrot.slane %v1067, %v1071
        %v1075 = vsel %vm286, %v1065, 0
        %1077 = vmatprep.subr.bf16.mxu0 0
        %1078 = vmatpush1.bf16.msra.mxu0 %v1075
        %1079 = vmatprep.subr.bf16.mxu0 0
        %1080 = vmatpush1.bf16.msra.mxu0 0
        %1081 = vmatprep.subr.bf16.mxu0 0
        %1082 = vmatpush1.bf16.msra.mxu0 0
        %1083 = vmatprep.subr.bf16.mxu0 0
        %1084 = vmatpush1.bf16.msra.mxu0 0
        %1085 = vmatprep.subr.bf16.mxu0 0
        %1086 = vmatpush1.bf16.msra.mxu0 0
        %1087 = vmatprep.subr.bf16.mxu0 0
        %1088 = vmatpush1.bf16.msra.mxu0 0
        %1089 = vmatprep.subr.bf16.mxu0 0
        %1090 = vmatpush1.bf16.msra.mxu0 0
        %1091 = vmatprep.subr.bf16.mxu0 0
        %1092 = vmatpush1.bf16.msra.mxu0 0
        %1093 = vmatprep.subr.bf16.mxu0 0
        %1094 = vmatpush1.bf16.msra.mxu0 0
        %1095 = vmatprep.subr.bf16.mxu0 0
        %1096 = vmatpush1.bf16.msra.mxu0 0
        %1097 = vmatprep.subr.bf16.mxu0 0
        %1098 = vmatpush1.bf16.msra.mxu0 0
        %1099 = vmatprep.subr.bf16.mxu0 0
        %1100 = vmatpush1.bf16.msra.mxu0 0
        %1101 = vmatprep.subr.bf16.mxu0 0
        %1102 = vmatpush1.bf16.msra.mxu0 0
        %1103 = vmatprep.subr.bf16.mxu0 0
        %1104 = vmatpush1.bf16.msra.mxu0 0
        %1105 = vmatprep.subr.bf16.mxu0 0
        %1106 = vmatpush1.bf16.msra.mxu0 0
        %1107 = vmatprep.subr.bf16.mxu0 0
        %1108 = vmatpush1.bf16.msra.mxu0 0
        %1109 = vmatprep.mubr.bf16.mxu0 0
        %1110 = vmatmul.mubr.bf16.gmra.mrb[0].mxu0 %v284
        %v1111 = vpop.f32.mrb[0].mxu0
        %v1112 = vadd.f32 %v1072, %v1111
        %v1113 = vpop.f32.mrb[0].mxu0
        %v1114 = vpop.f32.mrb[0].mxu0
        %v1115 = vpop.f32.mrb[0].mxu0
        %1116 = vdwg.mxu0
        %v1117 = vxor.u32 %v1112, 2147483648
        %v1118 = vmul.f32 %v1117, 1.442695
        %v1119 = vpow.pop %v1118
        %v1120 = vadd.f32 %v1119, 1.0
        %v1121 = vrcp.pop %v1120
        %v1122 = vmul.f32 1.0, %v1121
        %v1123 = vmul.f32 %v1112, %v1122
        %s1124 = scalar_lea.vmem [#allocation2], 192
        %v1125 = vld [vmem:[%s1124] sm:$0xf]
        %v1126 = vld [vmem:[%s1124 + $0x4] sm:$0xf]
        %v1127 = vld [vmem:[%s1124 + $0x8] sm:$0xf]
        %v1128 = vld [vmem:[%s1124 + $0xc] sm:$0xf]
        %v1129 = vpack.c.bf16 %v1123, %v1123
        %s1130 = scalar_lea.vmem %s4, 11
        %v1131 = vld [vmem:[%s1130] sm:$0x1]
        %v1133 = vlaneseq
        %v1134 = vshrl.u32 %v1133, 7
        %v1135 = vsub.s32 0, %v1134
        %v1136 = vrot.slane %v1131, %v1135
        %v1142 = vunpack.c.l.b16 %v1125
        %v1143 = vunpack.c.l.b16 %v1126
        %v1144 = vunpack.c.l.b16 %v1127
        %v1145 = vunpack.c.l.b16 %v1128
        %v1146 = vpack.c.b16 %v1143, %v1142
        %v1147 = vpack.c.b16 %v1145, %v1144
        %v1151 = vsel %vm370, %v1129, 0
        %1153 = vmatprep.subr.bf16.mxu0 0
        %1154 = vmatpush1.bf16.msra.mxu0 %v1146
        %1155 = vmatprep.subr.bf16.mxu0 0
        %1156 = vmatpush1.bf16.msra.mxu0 %v1147
        %1157 = vmatprep.subr.bf16.mxu0 0
        %1158 = vmatpush1.bf16.msra.mxu0 0
        %1159 = vmatprep.subr.bf16.mxu0 0
        %1160 = vmatpush1.bf16.msra.mxu0 0
        %1161 = vmatprep.subr.bf16.mxu0 0
        %1162 = vmatpush1.bf16.msra.mxu0 0
        %1163 = vmatprep.subr.bf16.mxu0 0
        %1164 = vmatpush1.bf16.msra.mxu0 0
        %1165 = vmatprep.subr.bf16.mxu0 0
        %1166 = vmatpush1.bf16.msra.mxu0 0
        %1167 = vmatprep.subr.bf16.mxu0 0
        %1168 = vmatpush1.bf16.msra.mxu0 0
        %1169 = vmatprep.subr.bf16.mxu0 0
        %1170 = vmatpush1.bf16.msra.mxu0 0
        %1171 = vmatprep.subr.bf16.mxu0 0
        %1172 = vmatpush1.bf16.msra.mxu0 0
        %1173 = vmatprep.subr.bf16.mxu0 0
        %1174 = vmatpush1.bf16.msra.mxu0 0
        %1175 = vmatprep.subr.bf16.mxu0 0
        %1176 = vmatpush1.bf16.msra.mxu0 0
        %1177 = vmatprep.subr.bf16.mxu0 0
        %1178 = vmatpush1.bf16.msra.mxu0 0
        %1179 = vmatprep.subr.bf16.mxu0 0
        %1180 = vmatpush1.bf16.msra.mxu0 0
        %1181 = vmatprep.subr.bf16.mxu0 0
        %1182 = vmatpush1.bf16.msra.mxu0 0
        %1183 = vmatprep.subr.bf16.mxu0 0
        %1184 = vmatpush1.bf16.msra.mxu0 0
        %1185 = vmatprep.mubr.bf16.mxu0 0
        %1186 = vmatmul.mubr.bf16.gmra.mrb[0].mxu0 %v1151
        %v1187 = vpop.f32.mrb[0].mxu0
        %v1188 = vadd.f32 %v1136, %v1187
        %v1189 = vpop.f32.mrb[0].mxu0
        %v1190 = vpop.f32.mrb[0].mxu0
        %v1191 = vpop.f32.mrb[0].mxu0
        %1192 = vdwg.mxu0
        %s1193 = scalar_lea.vmem [#allocation2], 208
        %v1194 = vld [vmem:[%s1193] sm:$0xf]
        %v1195 = vld [vmem:[%s1193 + $0x4] sm:$0xf]
        %v1196 = vld [vmem:[%s1193 + $0x8] sm:$0xf]
        %v1197 = vld [vmem:[%s1193 + $0xc] sm:$0xf]
        %v1198 = vpack.c.bf16 %v1059, %v1059
        %s1199 = scalar_lea.vmem %s4, 12
        %v1200 = vld [vmem:[%s1199] sm:$0x1]
        %v1202 = vlaneseq
        %v1203 = vshrl.u32 %v1202, 7
        %v1204 = vsub.s32 0, %v1203
        %v1205 = vrot.slane %v1200, %v1204
        %v1211 = vunpack.c.l.b16 %v1194
        %v1212 = vunpack.c.l.b16 %v1195
        %v1213 = vunpack.c.l.b16 %v1196
        %v1214 = vunpack.c.l.b16 %v1197
        %v1215 = vpack.c.b16 %v1212, %v1211
        %v1216 = vpack.c.b16 %v1214, %v1213
        %v1220 = vsel %vm370, %v1198, 0
        %1222 = vmatprep.subr.bf16.mxu0 0
        %1223 = vmatpush1.bf16.msra.mxu0 %v1215
        %1224 = vmatprep.subr.bf16.mxu0 0
        %1225 = vmatpush1.bf16.msra.mxu0 %v1216
        %1226 = vmatprep.subr.bf16.mxu0 0
        %1227 = vmatpush1.bf16.msra.mxu0 0
        %1228 = vmatprep.subr.bf16.mxu0 0
        %1229 = vmatpush1.bf16.msra.mxu0 0
        %1230 = vmatprep.subr.bf16.mxu0 0
        %1231 = vmatpush1.bf16.msra.mxu0 0
        %1232 = vmatprep.subr.bf16.mxu0 0
        %1233 = vmatpush1.bf16.msra.mxu0 0
        %1234 = vmatprep.subr.bf16.mxu0 0
        %1235 = vmatpush1.bf16.msra.mxu0 0
        %1236 = vmatprep.subr.bf16.mxu0 0
        %1237 = vmatpush1.bf16.msra.mxu0 0
        %1238 = vmatprep.subr.bf16.mxu0 0
        %1239 = vmatpush1.bf16.msra.mxu0 0
        %1240 = vmatprep.subr.bf16.mxu0 0
        %1241 = vmatpush1.bf16.msra.mxu0 0
        %1242 = vmatprep.subr.bf16.mxu0 0
        %1243 = vmatpush1.bf16.msra.mxu0 0
        %1244 = vmatprep.subr.bf16.mxu0 0
        %1245 = vmatpush1.bf16.msra.mxu0 0
        %1246 = vmatprep.subr.bf16.mxu0 0
        %1247 = vmatpush1.bf16.msra.mxu0 0
        %1248 = vmatprep.subr.bf16.mxu0 0
        %1249 = vmatpush1.bf16.msra.mxu0 0
        %1250 = vmatprep.subr.bf16.mxu0 0
        %1251 = vmatpush1.bf16.msra.mxu0 0
        %1252 = vmatprep.subr.bf16.mxu0 0
        %1253 = vmatpush1.bf16.msra.mxu0 0
        %1254 = vmatprep.mubr.bf16.mxu0 0
        %1255 = vmatmul.mubr.bf16.gmra.mrb[0].mxu0 %v1220
        %v1256 = vpop.f32.mrb[0].mxu0
        %v1257 = vadd.f32 %v1205, %v1256
        %v1258 = vpop.f32.mrb[0].mxu0
        %v1259 = vpop.f32.mrb[0].mxu0
        %v1260 = vpop.f32.mrb[0].mxu0
        %1261 = vdwg.mxu0
        %s1262 = scalar_lea.vmem [#allocation2], 224
        %v1263 = vld [vmem:[%s1262] sm:$0xf]
        %v1264 = vld [vmem:[%s1262 + $0x4] sm:$0xf]
        %v1265 = vld [vmem:[%s1262 + $0x8] sm:$0xf]
        %v1266 = vld [vmem:[%s1262 + $0xc] sm:$0xf]
        %v1267 = vpack.c.bf16 %v1188, %v1188
        %s1268 = scalar_lea.vmem %s4, 13
        %v1269 = vld [vmem:[%s1268] sm:$0x1]
        %v1271 = vlaneseq
        %v1272 = vshrl.u32 %v1271, 7
        %v1273 = vsub.s32 0, %v1272
        %v1274 = vrot.slane %v1269, %v1273
        %v1280 = vunpack.c.l.b16 %v1263
        %v1281 = vunpack.c.l.b16 %v1264
        %v1282 = vunpack.c.l.b16 %v1265
        %v1283 = vunpack.c.l.b16 %v1266
        %v1284 = vpack.c.b16 %v1281, %v1280
        %v1285 = vpack.c.b16 %v1283, %v1282
        %v1289 = vsel %vm370, %v1267, 0
        %1291 = vmatprep.subr.bf16.mxu0 0
        %1292 = vmatpush1.bf16.msra.mxu0 %v1284
        %1293 = vmatprep.subr.bf16.mxu0 0
        %1294 = vmatpush1.bf16.msra.mxu0 %v1285
        %1295 = vmatprep.subr.bf16.mxu0 0
        %1296 = vmatpush1.bf16.msra.mxu0 0
        %1297 = vmatprep.subr.bf16.mxu0 0
        %1298 = vmatpush1.bf16.msra.mxu0 0
        %1299 = vmatprep.subr.bf16.mxu0 0
        %1300 = vmatpush1.bf16.msra.mxu0 0
        %1301 = vmatprep.subr.bf16.mxu0 0
        %1302 = vmatpush1.bf16.msra.mxu0 0
        %1303 = vmatprep.subr.bf16.mxu0 0
        %1304 = vmatpush1.bf16.msra.mxu0 0
        %1305 = vmatprep.subr.bf16.mxu0 0
        %1306 = vmatpush1.bf16.msra.mxu0 0
        %1307 = vmatprep.subr.bf16.mxu0 0
        %1308 = vmatpush1.bf16.msra.mxu0 0
        %1309 = vmatprep.subr.bf16.mxu0 0
        %1310 = vmatpush1.bf16.msra.mxu0 0
        %1311 = vmatprep.subr.bf16.mxu0 0
        %1312 = vmatpush1.bf16.msra.mxu0 0
        %1313 = vmatprep.subr.bf16.mxu0 0
        %1314 = vmatpush1.bf16.msra.mxu0 0
        %1315 = vmatprep.subr.bf16.mxu0 0
        %1316 = vmatpush1.bf16.msra.mxu0 0
        %1317 = vmatprep.subr.bf16.mxu0 0
        %1318 = vmatpush1.bf16.msra.mxu0 0
        %1319 = vmatprep.subr.bf16.mxu0 0
        %1320 = vmatpush1.bf16.msra.mxu0 0
        %1321 = vmatprep.subr.bf16.mxu0 0
        %1322 = vmatpush1.bf16.msra.mxu0 0
        %1323 = vmatprep.mubr.bf16.mxu0 0
        %1324 = vmatmul.mubr.bf16.gmra.mrb[0].mxu0 %v1289
        %v1325 = vpop.f32.mrb[0].mxu0
        %v1326 = vadd.f32 %v1274, %v1325
        %v1327 = vpop.f32.mrb[0].mxu0
        %v1328 = vpop.f32.mrb[0].mxu0
        %v1329 = vpop.f32.mrb[0].mxu0
        %1330 = vdwg.mxu0
        %s1331 = scalar_lea.vmem [#allocation2], 240
        %v1332 = vld [vmem:[%s1331] sm:$0xf]
        %v1333 = vld [vmem:[%s1331 + $0x4] sm:$0xf]
        %v1334 = vld [vmem:[%s1331 + $0x8] sm:$0xf]
        %v1335 = vld [vmem:[%s1331 + $0xc] sm:$0xf]
        %v1336 = vpack.c.bf16 %v926, %v926
        %s1337 = scalar_lea.vmem %s4, 14
        %v1338 = vld [vmem:[%s1337] sm:$0x1]
        %v1340 = vlaneseq
        %v1341 = vshrl.u32 %v1340, 7
        %v1342 = vsub.s32 0, %v1341
        %v1343 = vrot.slane %v1338, %v1342
        %v1349 = vunpack.c.l.b16 %v1332
        %v1350 = vunpack.c.l.b16 %v1333
        %v1351 = vunpack.c.l.b16 %v1334
        %v1352 = vunpack.c.l.b16 %v1335
        %v1353 = vpack.c.b16 %v1350, %v1349
        %v1354 = vpack.c.b16 %v1352, %v1351
        %v1358 = vsel %vm370, %v1336, 0
        %1360 = vmatprep.subr.bf16.mxu0 0
        %1361 = vmatpush1.bf16.msra.mxu0 %v1353
        %1362 = vmatprep.subr.bf16.mxu0 0
        %1363 = vmatpush1.bf16.msra.mxu0 %v1354
        %1364 = vmatprep.subr.bf16.mxu0 0
        %1365 = vmatpush1.bf16.msra.mxu0 0
        %1366 = vmatprep.subr.bf16.mxu0 0
        %1367 = vmatpush1.bf16.msra.mxu0 0
        %1368 = vmatprep.subr.bf16.mxu0 0
        %1369 = vmatpush1.bf16.msra.mxu0 0
        %1370 = vmatprep.subr.bf16.mxu0 0
        %1371 = vmatpush1.bf16.msra.mxu0 0
        %1372 = vmatprep.subr.bf16.mxu0 0
        %1373 = vmatpush1.bf16.msra.mxu0 0
        %1374 = vmatprep.subr.bf16.mxu0 0
        %1375 = vmatpush1.bf16.msra.mxu0 0
        %1376 = vmatprep.subr.bf16.mxu0 0
        %1377 = vmatpush1.bf16.msra.mxu0 0
        %1378 = vmatprep.subr.bf16.mxu0 0
        %1379 = vmatpush1.bf16.msra.mxu0 0
        %1380 = vmatprep.subr.bf16.mxu0 0
        %1381 = vmatpush1.bf16.msra.mxu0 0
        %1382 = vmatprep.subr.bf16.mxu0 0
        %1383 = vmatpush1.bf16.msra.mxu0 0
        %1384 = vmatprep.subr.bf16.mxu0 0
        %1385 = vmatpush1.bf16.msra.mxu0 0
        %1386 = vmatprep.subr.bf16.mxu0 0
        %1387 = vmatpush1.bf16.msra.mxu0 0
        %1388 = vmatprep.subr.bf16.mxu0 0
        %1389 = vmatpush1.bf16.msra.mxu0 0
        %1390 = vmatprep.subr.bf16.mxu0 0
        %1391 = vmatpush1.bf16.msra.mxu0 0
        %1392 = vmatprep.mubr.bf16.mxu0 0
        %1393 = vmatmul.mubr.bf16.gmra.mrb[0].mxu0 %v1358
        %v1394 = vpop.f32.mrb[0].mxu0
        %v1395 = vadd.f32 %v1343, %v1394
        %v1396 = vpop.f32.mrb[0].mxu0
        %v1397 = vpop.f32.mrb[0].mxu0
        %v1398 = vpop.f32.mrb[0].mxu0
        %1399 = vdwg.mxu0
        %v1400 = vmul.f32 %v1257, 0.17677669
        %v1401 = vpack.c.bf16 %v1400, %v1400
        %v1402 = vpack.c.bf16 %v1326, %v1326
        %v1404 = vsel %vm370, %v1401, 0
        %v1407 = vsel %vm370, %v1402, 0
        %1409 = vmatprep.subr.bf16.mxu0 0
        %1410 = vmatpush1.bf16.xpose.msra.mxu0 %v1407
        %1411 = vmatprep.subr.bf16.mxu0 0
        %1412 = vmatpush1.bf16.xpose.msra.mxu0 0
        %1413 = vmatprep.subr.bf16.mxu0 0
        %1414 = vmatpush1.bf16.xpose.msra.mxu0 0
        %1415 = vmatprep.subr.bf16.mxu0 0
        %1416 = vmatpush1.bf16.xpose.msra.mxu0 0
        %1417 = vmatprep.subr.bf16.mxu0 0
        %1418 = vmatpush1.bf16.xpose.msra.mxu0 0
        %1419 = vmatprep.subr.bf16.mxu0 0
        %1420 = vmatpush1.bf16.xpose.msra.mxu0 0
        %1421 = vmatprep.subr.bf16.mxu0 0
        %1422 = vmatpush1.bf16.xpose.msra.mxu0 0
        %1423 = vmatprep.subr.bf16.mxu0 0
        %1424 = vmatpush1.bf16.xpose.msra.mxu0 0
        %1425 = vmatprep.subr.bf16.mxu0 0
        %1426 = vmatpush1.bf16.xpose.msra.mxu0 0
        %1427 = vmatprep.subr.bf16.mxu0 0
        %1428 = vmatpush1.bf16.xpose.msra.mxu0 0
        %1429 = vmatprep.subr.bf16.mxu0 0
        %1430 = vmatpush1.bf16.xpose.msra.mxu0 0
        %1431 = vmatprep.subr.bf16.mxu0 0
        %1432 = vmatpush1.bf16.xpose.msra.mxu0 0
        %1433 = vmatprep.subr.bf16.mxu0 0
        %1434 = vmatpush1.bf16.xpose.msra.mxu0 0
        %1435 = vmatprep.subr.bf16.mxu0 0
        %1436 = vmatpush1.bf16.xpose.msra.mxu0 0
        %1437 = vmatprep.subr.bf16.mxu0 0
        %1438 = vmatpush1.bf16.xpose.msra.mxu0 0
        %1439 = vmatprep.subr.bf16.mxu0 0
        %1440 = vmatpush1.bf16.xpose.msra.mxu0 0
        %1441 = vmatprep.mubr.bf16.mxu0 0
        %1442 = vmatmul.mubr.bf16.gmra.mrb[0].mxu0 %v1404
        %v1443 = vpop.f32.mrb[0].mxu0
        %v1444 = vadd.f32 0.0, %v1443
        %v1445 = vpop.f32.mrb[0].mxu0
        %v1446 = vpop.f32.mrb[0].mxu0
        %v1447 = vpop.f32.mrb[0].mxu0
        %1448 = vdwg.mxu0
        %v1449 = vsel %vm732, %v1444, -inf
        %1450 = vmax.xlane.f32.xlu0 %v1449
        %v1451 = vpop.xlane.xlu0 %1450
        %v1452 = vsub.f32 %v1444, %v1451
        %v1453 = vmul.f32 %v1452, 1.442695
        %v1454 = vpow.pop %v1453
        %v1455 = vsel %vm732, %v1454, 0.0
        %1456 = vadd.xlane.f32.xlu0 %v1455
        %v1457 = vpop.xlane.xlu0 %1456
        %v1458 = vrcp.pop %v1457
        %v1459 = vmul.f32 %v1454, %v1458
        %v1460 = vpack.c.bf16 %v1459, %v1459
        %v1461 = vpack.c.bf16 %v1395, %v1395
        %v1463 = vsel %vm732, %v1460, 0
        %v1466 = vsel %vm749, %v1461, 0
        %1468 = vmatprep.subr.bf16.mxu0 0
        %1469 = vmatpush1.bf16.msra.mxu0 %v1466
        %1470 = vmatprep.subr.bf16.mxu0 0
        %1471 = vmatpush1.bf16.msra.mxu0 0
        %1472 = vmatprep.subr.bf16.mxu0 0
        %1473 = vmatpush1.bf16.msra.mxu0 0
        %1474 = vmatprep.subr.bf16.mxu0 0
        %1475 = vmatpush1.bf16.msra.mxu0 0
        %1476 = vmatprep.subr.bf16.mxu0 0
        %1477 = vmatpush1.bf16.msra.mxu0 0
        %1478 = vmatprep.subr.bf16.mxu0 0
        %1479 = vmatpush1.bf16.msra.mxu0 0
        %1480 = vmatprep.subr.bf16.mxu0 0
        %1481 = vmatpush1.bf16.msra.mxu0 0
        %1482 = vmatprep.subr.bf16.mxu0 0
        %1483 = vmatpush1.bf16.msra.mxu0 0
        %1484 = vmatprep.subr.bf16.mxu0 0
        %1485 = vmatpush1.bf16.msra.mxu0 0
        %1486 = vmatprep.subr.bf16.mxu0 0
        %1487 = vmatpush1.bf16.msra.mxu0 0
        %1488 = vmatprep.subr.bf16.mxu0 0
        %1489 = vmatpush1.bf16.msra.mxu0 0
        %1490 = vmatprep.subr.bf16.mxu0 0
        %1491 = vmatpush1.bf16.msra.mxu0 0
        %1492 = vmatprep.subr.bf16.mxu0 0
        %1493 = vmatpush1.bf16.msra.mxu0 0
        %1494 = vmatprep.subr.bf16.mxu0 0
        %1495 = vmatpush1.bf16.msra.mxu0 0
        %1496 = vmatprep.subr.bf16.mxu0 0
        %1497 = vmatpush1.bf16.msra.mxu0 0
        %1498 = vmatprep.subr.bf16.mxu0 0
        %1499 = vmatpush1.bf16.msra.mxu0 0
        %1500 = vmatprep.mubr.bf16.mxu0 0
        %1501 = vmatmul.mubr.bf16.gmra.mrb[0].mxu0 %v1463
        %v1502 = vpop.f32.mrb[0].mxu0
        %v1503 = vadd.f32 0.0, %v1502
        %v1504 = vpop.f32.mrb[0].mxu0
        %v1505 = vpop.f32.mrb[0].mxu0
        %v1506 = vpop.f32.mrb[0].mxu0
        %1507 = vdwg.mxu0
        %s1508 = scalar_lea.vmem [#allocation2], 256
        %v1509 = vld [vmem:[%s1508] sm:$0xf]
        %v1510 = vld [vmem:[%s1508 + $0x4] sm:$0xf]
        %v1511 = vld [vmem:[%s1508 + $0x8] sm:$0xf]
        %v1512 = vld [vmem:[%s1508 + $0xc] sm:$0xf]
        %v1513 = vpack.c.bf16 %v1503, %v1503
        %s1514 = scalar_lea.vmem %s4, 15
        %v1515 = vld [vmem:[%s1514] sm:$0x1]
        %v1517 = vlaneseq
        %v1518 = vshrl.u32 %v1517, 7
        %v1519 = vsub.s32 0, %v1518
        %v1520 = vrot.slane %v1515, %v1519
        %v1526 = vunpack.c.l.b16 %v1509
        %v1527 = vunpack.c.l.b16 %v1510
        %v1528 = vunpack.c.l.b16 %v1511
        %v1529 = vunpack.c.l.b16 %v1512
        %v1530 = vpack.c.b16 %v1527, %v1526
        %v1531 = vpack.c.b16 %v1529, %v1528
        %v1535 = vsel %vm370, %v1513, 0
        %1537 = vmatprep.subr.bf16.mxu0 0
        %1538 = vmatpush1.bf16.msra.mxu0 %v1530
        %1539 = vmatprep.subr.bf16.mxu0 0
        %1540 = vmatpush1.bf16.msra.mxu0 %v1531
        %1541 = vmatprep.subr.bf16.mxu0 0
        %1542 = vmatpush1.bf16.msra.mxu0 0
        %1543 = vmatprep.subr.bf16.mxu0 0
        %1544 = vmatpush1.bf16.msra.mxu0 0
        %1545 = vmatprep.subr.bf16.mxu0 0
        %1546 = vmatpush1.bf16.msra.mxu0 0
        %1547 = vmatprep.subr.bf16.mxu0 0
        %1548 = vmatpush1.bf16.msra.mxu0 0
        %1549 = vmatprep.subr.bf16.mxu0 0
        %1550 = vmatpush1.bf16.msra.mxu0 0
        %1551 = vmatprep.subr.bf16.mxu0 0
        %1552 = vmatpush1.bf16.msra.mxu0 0
        %1553 = vmatprep.subr.bf16.mxu0 0
        %1554 = vmatpush1.bf16.msra.mxu0 0
        %1555 = vmatprep.subr.bf16.mxu0 0
        %1556 = vmatpush1.bf16.msra.mxu0 0
        %1557 = vmatprep.subr.bf16.mxu0 0
        %1558 = vmatpush1.bf16.msra.mxu0 0
        %1559 = vmatprep.subr.bf16.mxu0 0
        %1560 = vmatpush1.bf16.msra.mxu0 0
        %1561 = vmatprep.subr.bf16.mxu0 0
        %1562 = vmatpush1.bf16.msra.mxu0 0
        %1563 = vmatprep.subr.bf16.mxu0 0
        %1564 = vmatpush1.bf16.msra.mxu0 0
        %1565 = vmatprep.subr.bf16.mxu0 0
        %1566 = vmatpush1.bf16.msra.mxu0 0
        %1567 = vmatprep.subr.bf16.mxu0 0
        %1568 = vmatpush1.bf16.msra.mxu0 0
        %1569 = vmatprep.mubr.bf16.mxu0 0
        %1570 = vmatmul.mubr.bf16.gmra.mrb[0].mxu0 %v1535
        %v1571 = vpop.f32.mrb[0].mxu0
        %v1572 = vadd.f32 %v1520, %v1571
        %v1573 = vpop.f32.mrb[0].mxu0
        %v1574 = vpop.f32.mrb[0].mxu0
        %v1575 = vpop.f32.mrb[0].mxu0
        %1576 = vdwg.mxu0
        %1577 = vst.msk [vmem:[%s256] sm:$0xff] %vm370, %v1572
        %s1578 = sand.u32 %s148, 1
        %s1579 = scalar_lea.sflag [#allocation4], %s1578
        %s1580 = sand.u32 %s148, 1
        %s1581 = smul.addr %s1580, 8
        %s1582 = scalar_lea.vmem [#allocation5], %s1581
        // Predicated region
        $region45: #{tpu_custom_call.1} parent=39 // pred_check
          %p1583 = pneg %p158
        $region46: #{tpu_custom_call.1} parent=39 // pred_check_branch
          %1585 = sbr.rel (%p1583) target = $region48
        $region47: #{tpu_custom_call.1} parent=39 // pred_region
          %s1587 = ssub.s32 128, 128
          %1588 = vsyncadd %s1579, %s1587
          %s1589 = smul.addr %s20, 128
          %s1590 = scalar_lea.hbm %s5, %s1589
          %s1592 = sshll.u32 %s1582, 4
          %s1593 = int_to_ptr.vmem [resolvable:$true] %s1592
          %1595 = dma.vmem_to_hbm [thread:$0]  %s1593, 128, %s1590, %s1579
        $region48: #{tpu_custom_call.1} parent=39 // pred_fallthru
          _
      $region40: #{tpu_custom_call.1} parent=5 // pred_fallthru
        _
      %p1596 = scmp.le.s32.totalorder 2, %s15
      // Predicated region
      $region49: #{tpu_custom_call.1} parent=5 // pred_check
        %p1597 = pneg %p1596
      $region50: #{tpu_custom_call.1} parent=5 // pred_check_branch
        %1599 = sbr.rel (%p1597) target = $region52
      $region51: #{tpu_custom_call.1} parent=5 // pred_region
        %s1600 = ssub.s32 %s15, 2
        // Predicated region
        $region53: #{tpu_custom_call.1} parent=51 // pred_check
          %p1601 = pneg %p164
        $region54: #{tpu_custom_call.1} parent=51 // pred_check_branch
          %1603 = sbr.rel (%p1601) target = $region56
        $region55: #{tpu_custom_call.1} parent=51 // pred_region
          %s1604 = sand.u32 %s149, 1
          %s1605 = scalar_lea.sflag [#allocation4], %s1604
          %s1606 = sand.u32 %s149, 1
          %s1607 = smul.addr %s1606, 8
          %s1608 = scalar_lea.vmem [#allocation5], %s1607
          %1609 = dma.done %s1605, 128
        $region56: #{tpu_custom_call.1} parent=51 // pred_fallthru
          _
      $region52: #{tpu_custom_call.1} parent=5 // pred_fallthru
        _
    $region6: #{tpu_custom_call.1} parent=1 // loop_footer
      %s19 = sadd.s32 1, %s15
    $region7: #{tpu_custom_call.1} parent=1 // loop_footer_branch
      %14 = sbr.rel target = $region3
    $region8: #{tpu_custom_call.1} parent=1 // loop_exit
      _
    %1610 = vsyncpa [#allocation3], 1
    %s1611 = scalar_lea.sflag [#allocation3], 1
    %1612 = vsyncpa %s1611, 1
    %1613 = vsyncpa [#allocation4], 1
    %s1614 = scalar_lea.sflag [#allocation4], 1
    %1615 = vsyncpa %s1614, 1

</llo_original>
